<compile_context>
chip_gen: v5e
topology: v5e:2x2
jax: 0.10.0
libtpu: 0.0.40
codegen_flags: <defaults>
</compile_context>

<pallas_src>
import jax
import jax.numpy as jnp
from jax.experimental import pallas as pl
from jax.experimental.pallas import tpu as pltpu

LN_EPS = 1e-5   # PyTorch nn.LayerNorm default


def _conv1x1_ln_relu_kernel(x_ref, w_ref, p_ref, o_ref):
    # x_ref: (TN, Cin)   w_ref: (Cin, Cout)   p_ref: (3, Cout) = [bias; gamma; beta]
    # o_ref: (TN, Cout)
    x = x_ref[...].astype(jnp.float32)
    w = w_ref[...].astype(jnp.float32)
    bias = p_ref[0:1, :].astype(jnp.float32)     # (1, Cout)
    gamma = p_ref[1:2, :].astype(jnp.float32)    # (1, Cout)
    beta = p_ref[2:3, :].astype(jnp.float32)     # (1, Cout)

    # 1x1 conv == per-pixel channel mix; ride the otherwise-idle MXU.
    y = jnp.dot(x, w, preferred_element_type=jnp.float32) + bias   # (TN, Cout)

    # LayerNorm over channels (last dim), fused single pass:
    #   var = E[y^2] - mean^2   (no `centered` temporary, one read of y).
    inv_c = 1.0 / y.shape[-1]
    mean = jnp.sum(y, axis=-1, keepdims=True) * inv_c              # (TN, 1)
    mean_sq = jnp.sum(y * y, axis=-1, keepdims=True) * inv_c
    var = mean_sq - mean * mean
    inv = jax.lax.rsqrt(var + LN_EPS)                              # EUP
    y = (y - mean) * (inv * gamma) + beta

    # activation = ReLU
    o_ref[...] = jnp.maximum(y, 0.0).astype(o_ref.dtype)


def _round_up(x, m):
    return (x + m - 1) // m * m


def _choose_tiling(n, max_tile_n, min_pixels_per_core=1024):
    """Pick (num_tiles, tile_n).

    tile_n is a multiple of 8 (sublanes) so (tile_n, C) blocks tile cleanly.
    For non-trivial N the grid has an even number (>= 2) of tiles so the
    "parallel" axis can be sharded across v7x's two TensorCores; tiny problems
    stay single-tile (a forced split would be pure overhead).
    """
    n_al = _round_up(n, 8)
    if n_al <= max_tile_n:
        num_tiles = 2 if n_al >= 2 * min_pixels_per_core else 1
    else:
        num_tiles = pl.cdiv(n_al, max_tile_n)
        num_tiles += num_tiles % 2            # even split across the 2 TCs
    tile_n = _round_up(pl.cdiv(n_al, num_tiles), 8)
    return num_tiles, tile_n


def conv2d_forward(x, w, b, gamma, beta, *, max_tile_n=8192,
                   vmem_limit_bytes=48 * 1024 * 1024):
    """Fused 1x1 conv + bias + LayerNorm + ReLU (channels-last end to end).

    x: (B, H, W, Cin) NHWC; w: (Cin, Cout); b/gamma/beta: (Cout,).
    """
    B, H, W, Cin = x.shape
    Cout = w.shape[1]
    N = B * H * W

    max_tile_n = _round_up(max_tile_n, 8)
    num_tiles, tile_n = _choose_tiling(N, max_tile_n)
    N_pad = num_tiles * tile_n

    # Free reshape (NHWC is already channels-last / contiguous) — no transpose.
    x2 = x.reshape(N, Cin)
    if N_pad != N:
        x2 = jnp.pad(x2, ((0, N_pad - N), (0, 0)))

    # One packed parameter operand: rows = [conv bias, LN gamma, LN beta].
    params = jnp.stack([b, gamma, beta], axis=0).astype(jnp.float32)  # (3, Cout)

    out = pl.pallas_call(
        _conv1x1_ln_relu_kernel,
        out_shape=jax.ShapeDtypeStruct((N_pad, Cout), x.dtype),
        grid_spec=pltpu.PrefetchScalarGridSpec(
            num_scalar_prefetch=0,
            grid=(num_tiles,),
            in_specs=[
                pl.BlockSpec((tile_n, Cin), lambda i: (i, 0)),    # x, channels-last
                pl.BlockSpec((Cin, Cout), lambda i: (0, 0)),      # weights (tiny)
                pl.BlockSpec((3, Cout), lambda i: (0, 0)),        # [bias; gamma; beta]
            ],
            out_specs=pl.BlockSpec((tile_n, Cout), lambda i: (i, 0)),
        ),
        compiler_params=pltpu.CompilerParams(
            dimension_semantics=("parallel",),
            vmem_limit_bytes=vmem_limit_bytes,
        ),
    )(x2, jnp.asarray(w, dtype=x.dtype), params)

    # Drop row padding (no-op when N_pad == N); reshape back to NHWC is free.
    return out[:N].reshape(B, H, W, Cout)


def reference_forward(x, w, b, gamma, beta):
    # Pure-f32 elementwise conv (no dot) so the reference is independent of the
    # backend's default matmul pass count.
    xf = x.astype(jnp.float32)
    wf = w.astype(jnp.float32)
    y = jnp.sum(xf[..., :, None] * wf[None, None, None, :, :], axis=-2) + b
    mean = jnp.mean(y, axis=-1, keepdims=True)
    var = jnp.mean((y - mean) ** 2, axis=-1, keepdims=True)
    y = (y - mean) / jnp.sqrt(var + LN_EPS)
    y = y * gamma + beta
    return jnp.maximum(y, 0.0).astype(x.dtype)


if __name__ == "__main__":
    # Module config: conv2d(input_dim=4, output_dim=32, activation=ReLU, bn=True, use_bias=True)
    B, H, W, Cin, Cout = 2, 16, 16, 4, 32

    key = jax.random.PRNGKey(0)
    kx, kw, kb = jax.random.split(key, 3)

    # Inputs/weights are rounded to bf16-representable f32 values so the MXU
    # channel mix and the pure-f32 reference agree to f32 accuracy no matter
    # how many MXU passes the compiler chooses for f32 matmuls.
    x = jax.random.normal(kx, (B, H, W, Cin), dtype=jnp.float32)
    x = x.astype(jnp.bfloat16).astype(jnp.float32)

    fan_in = Cin  # 1x1 kernel
    bound = 1.0 / (fan_in ** 0.5)
    w = jax.random.uniform(kw, (Cin, Cout), jnp.float32, -bound, bound)
    w = w.astype(jnp.bfloat16).astype(jnp.float32)
    b = jax.random.uniform(kb, (Cout,), jnp.float32, -bound, bound)
    gamma = jnp.ones((Cout,), jnp.float32)   # LayerNorm weight init
    beta = jnp.zeros((Cout,), jnp.float32)   # LayerNorm bias init

    out = conv2d_forward(x, w, b, gamma, beta)
    out = jax.block_until_ready(out)

    ref = reference_forward(x, w, b, gamma, beta)
    assert out.shape == (B, H, W, Cout)
    max_err = float(jnp.max(jnp.abs(out - ref)))
    assert jnp.allclose(out, ref, atol=1e-4, rtol=1e-4), max_err

    print("KERNEL_OK")
</pallas_src>

<mosaic_0001>
module attributes {stable_mosaic.version = 11 : i64} {
  func.func @_conv1x1_ln_relu_kernel(%arg0: i32, %arg1: memref<512x4xf32, #tpu.memory_space<vmem>>, %arg2: memref<4x32xf32, #tpu.memory_space<vmem>>, %arg3: memref<3x32xf32, #tpu.memory_space<vmem>>, %arg4: memref<512x32xf32, #tpu.memory_space<vmem>>) attributes {dimension_semantics = [#tpu.dimension_semantics<parallel>], iteration_bounds = array<i64: 1>, scalar_prefetch = 0 : i64, scratch_operands = 0 : i64, tpu.core_type = #tpu.core_type<tc>, window_params = [{transform_indices = @transform_0, window_bounds = array<i64: 512, 4>}, {pipeline_mode = #tpu.pipeline_mode<synchronous>, transform_indices = @transform_1, window_bounds = array<i64: 4, 32>}, {pipeline_mode = #tpu.pipeline_mode<synchronous>, transform_indices = @transform_2, window_bounds = array<i64: 3, 32>}, {transform_indices = @transform_3, window_bounds = array<i64: 512, 32>}]} {
    %c0 = arith.constant 0 : index
    %c0_0 = arith.constant 0 : index
    %0 = vector.load %arg1[%c0, %c0_0] : memref<512x4xf32, #tpu.memory_space<vmem>>, vector<512x4xf32>
    %c0_1 = arith.constant 0 : index
    %c0_2 = arith.constant 0 : index
    %1 = vector.load %arg2[%c0_1, %c0_2] : memref<4x32xf32, #tpu.memory_space<vmem>>, vector<4x32xf32>
    %c0_3 = arith.constant 0 : index
    %c0_4 = arith.constant 0 : index
    %2 = vector.load %arg3[%c0_3, %c0_4] : memref<3x32xf32, #tpu.memory_space<vmem>>, vector<1x32xf32>
    %c1 = arith.constant 1 : index
    %c0_5 = arith.constant 0 : index
    %3 = vector.load %arg3[%c1, %c0_5] : memref<3x32xf32, #tpu.memory_space<vmem>>, vector<1x32xf32>
    %c2 = arith.constant 2 : index
    %c0_6 = arith.constant 0 : index
    %4 = vector.load %arg3[%c2, %c0_6] : memref<3x32xf32, #tpu.memory_space<vmem>>, vector<1x32xf32>
    %cst = arith.constant dense<0.000000e+00> : vector<512x32xf32>
    %5 = tpu.matmul %0, %1, %cst {dimension_numbers = #tpu.dot_dimension_numbers<[1], [0], [0], [1], [0, 0, 1, 1], [], []>} : vector<512x4xf32>, vector<4x32xf32>, vector<512x32xf32> -> vector<512x32xf32>
    %6 = vector.broadcast %2 : vector<1x32xf32> to vector<512x32xf32>
    %7 = arith.addf %5, %6 : vector<512x32xf32>
    %cst_7 = arith.constant dense<0.000000e+00> : vector<512xf32>
    %8 = vector.multi_reduction <add>, %7, %cst_7 [1] : vector<512x32xf32> to vector<512xf32>
    %9 = vector.shape_cast %8 : vector<512xf32> to vector<512x1xf32>
    %cst_8 = arith.constant 3.125000e-02 : f32
    %10 = vector.broadcast %cst_8 : f32 to vector<512x1xf32>
    %11 = arith.mulf %9, %10 : vector<512x1xf32>
    %12 = arith.mulf %7, %7 : vector<512x32xf32>
    %cst_9 = arith.constant dense<0.000000e+00> : vector<512xf32>
    %13 = vector.multi_reduction <add>, %12, %cst_9 [1] : vector<512x32xf32> to vector<512xf32>
    %14 = vector.shape_cast %13 : vector<512xf32> to vector<512x1xf32>
    %cst_10 = arith.constant 3.125000e-02 : f32
    %15 = vector.broadcast %cst_10 : f32 to vector<512x1xf32>
    %16 = arith.mulf %14, %15 : vector<512x1xf32>
    %17 = arith.mulf %11, %11 : vector<512x1xf32>
    %18 = arith.subf %16, %17 : vector<512x1xf32>
    %cst_11 = arith.constant 9.99999974E-6 : f32
    %19 = vector.broadcast %cst_11 : f32 to vector<512x1xf32>
    %20 = arith.addf %18, %19 : vector<512x1xf32>
    %21 = math.rsqrt %20 : vector<512x1xf32>
    %22 = vector.broadcast %11 : vector<512x1xf32> to vector<512x32xf32>
    %23 = arith.subf %7, %22 : vector<512x32xf32>
    %24 = vector.broadcast %21 : vector<512x1xf32> to vector<512x32xf32>
    %25 = vector.broadcast %3 : vector<1x32xf32> to vector<512x32xf32>
    %26 = arith.mulf %24, %25 : vector<512x32xf32>
    %27 = arith.mulf %23, %26 : vector<512x32xf32>
    %28 = vector.broadcast %4 : vector<1x32xf32> to vector<512x32xf32>
    %29 = arith.addf %27, %28 : vector<512x32xf32>
    %cst_12 = arith.constant 0.000000e+00 : f32
    %30 = vector.broadcast %cst_12 : f32 to vector<512x32xf32>
    %31 = arith.maximumf %29, %30 : vector<512x32xf32>
    %c0_13 = arith.constant 0 : index
    %c0_14 = arith.constant 0 : index
    %32 = vector.load %arg4[%c0_13, %c0_14] : memref<512x32xf32, #tpu.memory_space<vmem>>, vector<512x32xf32>
    tpu.vector_store %arg4[%c0_13, %c0_14], %31 {strides = array<i32>} : memref<512x32xf32, #tpu.memory_space<vmem>>, vector<512x32xf32>,
    return
  }
  func.func @transform_0(%arg0: i32) -> (i32, i32) {
    %c0_i32 = arith.constant 0 : i32
    %c0_i32_0 = arith.constant 0 : i32
    return %arg0, %c0_i32 : i32, i32
  }
  func.func @transform_1(%arg0: i32) -> (i32, i32) {
    %c0_i32 = arith.constant 0 : i32
    %c0_i32_0 = arith.constant 0 : i32
    %c0_i32_1 = arith.constant 0 : i32
    return %c0_i32, %c0_i32_0 : i32, i32
  }
  func.func @transform_2(%arg0: i32) -> (i32, i32) {
    %c0_i32 = arith.constant 0 : i32
    %c0_i32_0 = arith.constant 0 : i32
    %c0_i32_1 = arith.constant 0 : i32
    return %c0_i32, %c0_i32_0 : i32, i32
  }
  func.func @transform_3(%arg0: i32) -> (i32, i32) {
    %c0_i32 = arith.constant 0 : i32
    %c0_i32_0 = arith.constant 0 : i32
    return %arg0, %c0_i32 : i32, i32
  }
}

</mosaic_0001>

<llo_original>
// kernel: tpu_custom_call.1
$region0: #{tpu_custom_call.1}
  #allocation0 [shape = 'u32[]', space=smem, size = 0x4, offset = 0x4, fixed_abs, tag = 'smem constant byte address 0x4 - core index']
  #allocation1 [shape = 'u32[72,128]{1,0:T(1,128)}', space=vmem, size = 0x9000, scoped, tag = 'internal scratch']
  %s0 = inlined_call_operand.vmem [shape: f32[512,4], index: 0, kind: input, shape index: {}]
  %s1 = inlined_call_operand.vmem [shape: f32[4,32], index: 1, kind: input, shape index: {}]
  %s2 = inlined_call_operand.vmem [shape: f32[3,32], index: 2, kind: input, shape index: {}]
  %s3 = inlined_call_operand.vmem [shape: f32[512,32], index: 3, kind: output, shape index: {}]
  %s4 = sld [smem:[#allocation0]]
  $region22: #{tpu_custom_call.1} parent=0
    _
  %s6 = ssub.s32 1, %s4
  %s7 = scalar_select 0, %s6, %s4
  // Predicated region
  $region2: #{tpu_custom_call.1} parent=0 // pred_check
    _
  $region3: #{tpu_custom_call.1} parent=0 // pred_check_branch
    %9 = sbr.rel (0) target = $region5
  $region4: #{tpu_custom_call.1} parent=0 // pred_region
    _
  $region5: #{tpu_custom_call.1} parent=0 // pred_fallthru
    _
  // Predicated region
  $region6: #{tpu_custom_call.1} parent=0 // pred_check
    _
  $region7: #{tpu_custom_call.1} parent=0 // pred_check_branch
    %11 = sbr.rel (0) target = $region9
  $region8: #{tpu_custom_call.1} parent=0 // pred_region
    _
  $region9: #{tpu_custom_call.1} parent=0 // pred_fallthru
    _
  // Predicated region
  $region10: #{tpu_custom_call.1} parent=0 // pred_check
    _
  $region11: #{tpu_custom_call.1} parent=0 // pred_check_branch
    %13 = sbr.rel (0) target = $region13
  $region12: #{tpu_custom_call.1} parent=0 // pred_region
    _
  $region13: #{tpu_custom_call.1} parent=0 // pred_fallthru
    _
  %v14 = vld [vmem:[%s0] sm:$0xff]
  %v15 = vld [vmem:[%s0 + $0x8] sm:$0xff]
  %v16 = vld [vmem:[%s0 + $0x10] sm:$0xff]
  %v17 = vld [vmem:[%s0 + $0x18] sm:$0xff]
  %v18 = vld [vmem:[%s0 + $0x20] sm:$0xff]
  %v19 = vld [vmem:[%s0 + $0x28] sm:$0xff]
  %v20 = vld [vmem:[%s0 + $0x30] sm:$0xff]
  %v21 = vld [vmem:[%s0 + $0x38] sm:$0xff]
  %v22 = vld [vmem:[%s0 + $0x40] sm:$0xff]
  %v23 = vld [vmem:[%s0 + $0x48] sm:$0xff]
  %v24 = vld [vmem:[%s0 + $0x50] sm:$0xff]
  %v25 = vld [vmem:[%s0 + $0x58] sm:$0xff]
  %v26 = vld [vmem:[%s0 + $0x60] sm:$0xff]
  %v27 = vld [vmem:[%s0 + $0x68] sm:$0xff]
  %v28 = vld [vmem:[%s0 + $0x70] sm:$0xff]
  %v29 = vld [vmem:[%s0 + $0x78] sm:$0xff]
  %v30 = vld [vmem:[%s0 + $0x80] sm:$0xff]
  %v31 = vld [vmem:[%s0 + $0x88] sm:$0xff]
  %v32 = vld [vmem:[%s0 + $0x90] sm:$0xff]
  %v33 = vld [vmem:[%s0 + $0x98] sm:$0xff]
  %v34 = vld [vmem:[%s0 + $0xa0] sm:$0xff]
  %v35 = vld [vmem:[%s0 + $0xa8] sm:$0xff]
  %v36 = vld [vmem:[%s0 + $0xb0] sm:$0xff]
  %v37 = vld [vmem:[%s0 + $0xb8] sm:$0xff]
  %v38 = vld [vmem:[%s0 + $0xc0] sm:$0xff]
  %v39 = vld [vmem:[%s0 + $0xc8] sm:$0xff]
  %v40 = vld [vmem:[%s0 + $0xd0] sm:$0xff]
  %v41 = vld [vmem:[%s0 + $0xd8] sm:$0xff]
  %v42 = vld [vmem:[%s0 + $0xe0] sm:$0xff]
  %v43 = vld [vmem:[%s0 + $0xe8] sm:$0xff]
  %v44 = vld [vmem:[%s0 + $0xf0] sm:$0xff]
  %v45 = vld [vmem:[%s0 + $0xf8] sm:$0xff]
  %v46 = vld [vmem:[%s0 + $0x100] sm:$0xff]
  %v47 = vld [vmem:[%s0 + $0x108] sm:$0xff]
  %v48 = vld [vmem:[%s0 + $0x110] sm:$0xff]
  %v49 = vld [vmem:[%s0 + $0x118] sm:$0xff]
  %v50 = vld [vmem:[%s0 + $0x120] sm:$0xff]
  %v51 = vld [vmem:[%s0 + $0x128] sm:$0xff]
  %v52 = vld [vmem:[%s0 + $0x130] sm:$0xff]
  %v53 = vld [vmem:[%s0 + $0x138] sm:$0xff]
  %v54 = vld [vmem:[%s0 + $0x140] sm:$0xff]
  %v55 = vld [vmem:[%s0 + $0x148] sm:$0xff]
  %v56 = vld [vmem:[%s0 + $0x150] sm:$0xff]
  %v57 = vld [vmem:[%s0 + $0x158] sm:$0xff]
  %v58 = vld [vmem:[%s0 + $0x160] sm:$0xff]
  %v59 = vld [vmem:[%s0 + $0x168] sm:$0xff]
  %v60 = vld [vmem:[%s0 + $0x170] sm:$0xff]
  %v61 = vld [vmem:[%s0 + $0x178] sm:$0xff]
  %v62 = vld [vmem:[%s0 + $0x180] sm:$0xff]
  %v63 = vld [vmem:[%s0 + $0x188] sm:$0xff]
  %v64 = vld [vmem:[%s0 + $0x190] sm:$0xff]
  %v65 = vld [vmem:[%s0 + $0x198] sm:$0xff]
  %v66 = vld [vmem:[%s0 + $0x1a0] sm:$0xff]
  %v67 = vld [vmem:[%s0 + $0x1a8] sm:$0xff]
  %v68 = vld [vmem:[%s0 + $0x1b0] sm:$0xff]
  %v69 = vld [vmem:[%s0 + $0x1b8] sm:$0xff]
  %v70 = vld [vmem:[%s0 + $0x1c0] sm:$0xff]
  %v71 = vld [vmem:[%s0 + $0x1c8] sm:$0xff]
  %v72 = vld [vmem:[%s0 + $0x1d0] sm:$0xff]
  %v73 = vld [vmem:[%s0 + $0x1d8] sm:$0xff]
  %v74 = vld [vmem:[%s0 + $0x1e0] sm:$0xff]
  %v75 = vld [vmem:[%s0 + $0x1e8] sm:$0xff]
  %v76 = vld [vmem:[%s0 + $0x1f0] sm:$0xff]
  %v77 = vld [vmem:[%s0 + $0x1f8] sm:$0xff]
  %v78 = vld [vmem:[%s1] sm:$0xf]
  %v79 = vld [vmem:[%s2] sm:$0x1]
  %v80 = vld [vmem:[%s2 + $0x1] sm:$0x1]
  %v81 = vld [vmem:[%s2 + $0x2] sm:$0x1]
  %v82 = vperm.slane %v79, 0
  %vm83 = vcmask 31744
  %v85 = vsel %vm83, %v14, 0
  %v88 = vsel %vm83, %v15, 0
  %v91 = vsel %vm83, %v16, 0
  %v94 = vsel %vm83, %v17, 0
  %v97 = vsel %vm83, %v18, 0
  %v100 = vsel %vm83, %v19, 0
  %v103 = vsel %vm83, %v20, 0
  %v106 = vsel %vm83, %v21, 0
  %v109 = vsel %vm83, %v22, 0
  %v112 = vsel %vm83, %v23, 0
  %v115 = vsel %vm83, %v24, 0
  %v118 = vsel %vm83, %v25, 0
  %v121 = vsel %vm83, %v26, 0
  %v124 = vsel %vm83, %v27, 0
  %v127 = vsel %vm83, %v28, 0
  %v130 = vsel %vm83, %v29, 0
  %v133 = vsel %vm83, %v30, 0
  %v136 = vsel %vm83, %v31, 0
  %v139 = vsel %vm83, %v32, 0
  %v142 = vsel %vm83, %v33, 0
  %v145 = vsel %vm83, %v34, 0
  %v148 = vsel %vm83, %v35, 0
  %v151 = vsel %vm83, %v36, 0
  %v154 = vsel %vm83, %v37, 0
  %v157 = vsel %vm83, %v38, 0
  %v160 = vsel %vm83, %v39, 0
  %v163 = vsel %vm83, %v40, 0
  %v166 = vsel %vm83, %v41, 0
  %v169 = vsel %vm83, %v42, 0
  %v172 = vsel %vm83, %v43, 0
  %v175 = vsel %vm83, %v44, 0
  %v178 = vsel %vm83, %v45, 0
  %v181 = vsel %vm83, %v46, 0
  %v184 = vsel %vm83, %v47, 0
  %v187 = vsel %vm83, %v48, 0
  %v190 = vsel %vm83, %v49, 0
  %v193 = vsel %vm83, %v50, 0
  %v196 = vsel %vm83, %v51, 0
  %v199 = vsel %vm83, %v52, 0
  %v202 = vsel %vm83, %v53, 0
  %v205 = vsel %vm83, %v54, 0
  %v208 = vsel %vm83, %v55, 0
  %v211 = vsel %vm83, %v56, 0
  %v214 = vsel %vm83, %v57, 0
  %v217 = vsel %vm83, %v58, 0
  %v220 = vsel %vm83, %v59, 0
  %v223 = vsel %vm83, %v60, 0
  %v226 = vsel %vm83, %v61, 0
  %v229 = vsel %vm83, %v62, 0
  %v232 = vsel %vm83, %v63, 0
  %v235 = vsel %vm83, %v64, 0
  %v238 = vsel %vm83, %v65, 0
  %v241 = vsel %vm83, %v66, 0
  %v244 = vsel %vm83, %v67, 0
  %v247 = vsel %vm83, %v68, 0
  %v250 = vsel %vm83, %v69, 0
  %v253 = vsel %vm83, %v70, 0
  %v256 = vsel %vm83, %v71, 0
  %v259 = vsel %vm83, %v72, 0
  %v262 = vsel %vm83, %v73, 0
  %v265 = vsel %vm83, %v74, 0
  %v268 = vsel %vm83, %v75, 0
  %v271 = vsel %vm83, %v76, 0
  %v274 = vsel %vm83, %v77, 0
  %vm276 = vcmask 1043456
  %v278 = vsel %vm276, %v78, 0
  %280 = vmatpush.msra.mxu0 0.0
  %281 = vmatpush.msra.mxu0 0.0
  %282 = vmatpush.msra.mxu0 0.0
  %283 = vmatpush.msra.mxu0 0.0
  %284 = vmatpush.msra.mxu0 0.0
  %285 = vmatpush.msra.mxu0 0.0
  %286 = vmatpush.msra.mxu0 0.0
  %287 = vmatpush.msra.mxu0 0.0
  %288 = vmatpush.msra.mxu0 0.0
  %289 = vmatpush.msra.mxu0 0.0
  %290 = vmatpush.msra.mxu0 0.0
  %291 = vmatpush.msra.mxu0 0.0
  %292 = vmatpush.msra.mxu0 0.0
  %293 = vmatpush.msra.mxu0 0.0
  %294 = vmatpush.msra.mxu0 0.0
  %295 = vmatpush.msra.mxu0 %v278
  %296 = vmatmul.f32.gmra.mxu0 %v85
  %v297 = vpop.f32.mrf.mxu0
  %v298 = vadd.f32 %v82, %v297
  %299 = vmatmul.f32.gmra.mxu0 %v88
  %v300 = vpop.f32.mrf.mxu0
  %v301 = vadd.f32 %v82, %v300
  %302 = vmatmul.f32.gmra.mxu0 %v91
  %v303 = vpop.f32.mrf.mxu0
  %v304 = vadd.f32 %v82, %v303
  %305 = vmatmul.f32.gmra.mxu0 %v94
  %v306 = vpop.f32.mrf.mxu0
  %v307 = vadd.f32 %v82, %v306
  %308 = vmatmul.f32.gmra.mxu0 %v97
  %v309 = vpop.f32.mrf.mxu0
  %v310 = vadd.f32 %v82, %v309
  %311 = vmatmul.f32.gmra.mxu0 %v100
  %v312 = vpop.f32.mrf.mxu0
  %v313 = vadd.f32 %v82, %v312
  %314 = vmatmul.f32.gmra.mxu0 %v103
  %v315 = vpop.f32.mrf.mxu0
  %v316 = vadd.f32 %v82, %v315
  %317 = vmatmul.f32.gmra.mxu0 %v106
  %v318 = vpop.f32.mrf.mxu0
  %v319 = vadd.f32 %v82, %v318
  %320 = vmatmul.f32.gmra.mxu0 %v109
  %v321 = vpop.f32.mrf.mxu0
  %v322 = vadd.f32 %v82, %v321
  %323 = vmatmul.f32.gmra.mxu0 %v112
  %v324 = vpop.f32.mrf.mxu0
  %v325 = vadd.f32 %v82, %v324
  %326 = vmatmul.f32.gmra.mxu0 %v115
  %v327 = vpop.f32.mrf.mxu0
  %v328 = vadd.f32 %v82, %v327
  %329 = vmatmul.f32.gmra.mxu0 %v118
  %v330 = vpop.f32.mrf.mxu0
  %v331 = vadd.f32 %v82, %v330
  %332 = vmatmul.f32.gmra.mxu0 %v121
  %v333 = vpop.f32.mrf.mxu0
  %v334 = vadd.f32 %v82, %v333
  %335 = vmatmul.f32.gmra.mxu0 %v124
  %v336 = vpop.f32.mrf.mxu0
  %v337 = vadd.f32 %v82, %v336
  %338 = vmatmul.f32.gmra.mxu0 %v127
  %v339 = vpop.f32.mrf.mxu0
  %v340 = vadd.f32 %v82, %v339
  %341 = vmatmul.f32.gmra.mxu0 %v130
  %v342 = vpop.f32.mrf.mxu0
  %v343 = vadd.f32 %v82, %v342
  %344 = vmatmul.f32.gmra.mxu0 %v133
  %v345 = vpop.f32.mrf.mxu0
  %v346 = vadd.f32 %v82, %v345
  %347 = vmatmul.f32.gmra.mxu0 %v136
  %v348 = vpop.f32.mrf.mxu0
  %v349 = vadd.f32 %v82, %v348
  %350 = vmatmul.f32.gmra.mxu0 %v139
  %v351 = vpop.f32.mrf.mxu0
  %v352 = vadd.f32 %v82, %v351
  %353 = vmatmul.f32.gmra.mxu0 %v142
  %v354 = vpop.f32.mrf.mxu0
  %v355 = vadd.f32 %v82, %v354
  %356 = vmatmul.f32.gmra.mxu0 %v145
  %v357 = vpop.f32.mrf.mxu0
  %v358 = vadd.f32 %v82, %v357
  %359 = vmatmul.f32.gmra.mxu0 %v148
  %v360 = vpop.f32.mrf.mxu0
  %v361 = vadd.f32 %v82, %v360
  %362 = vmatmul.f32.gmra.mxu0 %v151
  %v363 = vpop.f32.mrf.mxu0
  %v364 = vadd.f32 %v82, %v363
  %365 = vmatmul.f32.gmra.mxu0 %v154
  %v366 = vpop.f32.mrf.mxu0
  %v367 = vadd.f32 %v82, %v366
  %368 = vmatmul.f32.gmra.mxu0 %v157
  %v369 = vpop.f32.mrf.mxu0
  %v370 = vadd.f32 %v82, %v369
  %371 = vmatmul.f32.gmra.mxu0 %v160
  %v372 = vpop.f32.mrf.mxu0
  %v373 = vadd.f32 %v82, %v372
  %374 = vmatmul.f32.gmra.mxu0 %v163
  %v375 = vpop.f32.mrf.mxu0
  %v376 = vadd.f32 %v82, %v375
  %377 = vmatmul.f32.gmra.mxu0 %v166
  %v378 = vpop.f32.mrf.mxu0
  %v379 = vadd.f32 %v82, %v378
  %380 = vmatmul.f32.gmra.mxu0 %v169
  %v381 = vpop.f32.mrf.mxu0
  %v382 = vadd.f32 %v82, %v381
  %383 = vmatmul.f32.gmra.mxu0 %v172
  %v384 = vpop.f32.mrf.mxu0
  %v385 = vadd.f32 %v82, %v384
  %386 = vmatmul.f32.gmra.mxu0 %v175
  %v387 = vpop.f32.mrf.mxu0
  %v388 = vadd.f32 %v82, %v387
  %389 = vmatmul.f32.gmra.mxu0 %v178
  %v390 = vpop.f32.mrf.mxu0
  %v391 = vadd.f32 %v82, %v390
  %392 = vmatmul.f32.gmra.mxu0 %v181
  %v393 = vpop.f32.mrf.mxu0
  %v394 = vadd.f32 %v82, %v393
  %395 = vmatmul.f32.gmra.mxu0 %v184
  %v396 = vpop.f32.mrf.mxu0
  %v397 = vadd.f32 %v82, %v396
  %398 = vmatmul.f32.gmra.mxu0 %v187
  %v399 = vpop.f32.mrf.mxu0
  %v400 = vadd.f32 %v82, %v399
  %401 = vmatmul.f32.gmra.mxu0 %v190
  %v402 = vpop.f32.mrf.mxu0
  %v403 = vadd.f32 %v82, %v402
  %404 = vmatmul.f32.gmra.mxu0 %v193
  %v405 = vpop.f32.mrf.mxu0
  %v406 = vadd.f32 %v82, %v405
  %407 = vmatmul.f32.gmra.mxu0 %v196
  %v408 = vpop.f32.mrf.mxu0
  %v409 = vadd.f32 %v82, %v408
  %410 = vmatmul.f32.gmra.mxu0 %v199
  %v411 = vpop.f32.mrf.mxu0
  %v412 = vadd.f32 %v82, %v411
  %413 = vmatmul.f32.gmra.mxu0 %v202
  %v414 = vpop.f32.mrf.mxu0
  %v415 = vadd.f32 %v82, %v414
  %416 = vmatmul.f32.gmra.mxu0 %v205
  %v417 = vpop.f32.mrf.mxu0
  %v418 = vadd.f32 %v82, %v417
  %419 = vmatmul.f32.gmra.mxu0 %v208
  %v420 = vpop.f32.mrf.mxu0
  %v421 = vadd.f32 %v82, %v420
  %422 = vmatmul.f32.gmra.mxu0 %v211
  %v423 = vpop.f32.mrf.mxu0
  %v424 = vadd.f32 %v82, %v423
  %425 = vmatmul.f32.gmra.mxu0 %v214
  %v426 = vpop.f32.mrf.mxu0
  %v427 = vadd.f32 %v82, %v426
  %428 = vmatmul.f32.gmra.mxu0 %v217
  %v429 = vpop.f32.mrf.mxu0
  %v430 = vadd.f32 %v82, %v429
  %431 = vmatmul.f32.gmra.mxu0 %v220
  %v432 = vpop.f32.mrf.mxu0
  %v433 = vadd.f32 %v82, %v432
  %434 = vmatmul.f32.gmra.mxu0 %v223
  %v435 = vpop.f32.mrf.mxu0
  %v436 = vadd.f32 %v82, %v435
  %437 = vmatmul.f32.gmra.mxu0 %v226
  %v438 = vpop.f32.mrf.mxu0
  %v439 = vadd.f32 %v82, %v438
  %440 = vmatmul.f32.gmra.mxu0 %v229
  %v441 = vpop.f32.mrf.mxu0
  %v442 = vadd.f32 %v82, %v441
  %443 = vmatmul.f32.gmra.mxu0 %v232
  %v444 = vpop.f32.mrf.mxu0
  %v445 = vadd.f32 %v82, %v444
  %446 = vmatmul.f32.gmra.mxu0 %v235
  %v447 = vpop.f32.mrf.mxu0
  %v448 = vadd.f32 %v82, %v447
  %449 = vmatmul.f32.gmra.mxu0 %v238
  %v450 = vpop.f32.mrf.mxu0
  %v451 = vadd.f32 %v82, %v450
  %452 = vmatmul.f32.gmra.mxu0 %v241
  %v453 = vpop.f32.mrf.mxu0
  %v454 = vadd.f32 %v82, %v453
  %455 = vmatmul.f32.gmra.mxu0 %v244
  %v456 = vpop.f32.mrf.mxu0
  %v457 = vadd.f32 %v82, %v456
  %458 = vmatmul.f32.gmra.mxu0 %v247
  %v459 = vpop.f32.mrf.mxu0
  %v460 = vadd.f32 %v82, %v459
  %461 = vmatmul.f32.gmra.mxu0 %v250
  %v462 = vpop.f32.mrf.mxu0
  %v463 = vadd.f32 %v82, %v462
  %464 = vmatmul.f32.gmra.mxu0 %v253
  %v465 = vpop.f32.mrf.mxu0
  %v466 = vadd.f32 %v82, %v465
  %467 = vmatmul.f32.gmra.mxu0 %v256
  %v468 = vpop.f32.mrf.mxu0
  %v469 = vadd.f32 %v82, %v468
  %470 = vmatmul.f32.gmra.mxu0 %v259
  %v471 = vpop.f32.mrf.mxu0
  %v472 = vadd.f32 %v82, %v471
  %473 = vmatmul.f32.gmra.mxu0 %v262
  %v474 = vpop.f32.mrf.mxu0
  %v475 = vadd.f32 %v82, %v474
  %476 = vmatmul.f32.gmra.mxu0 %v265
  %v477 = vpop.f32.mrf.mxu0
  %v478 = vadd.f32 %v82, %v477
  %479 = vmatmul.f32.gmra.mxu0 %v268
  %v480 = vpop.f32.mrf.mxu0
  %v481 = vadd.f32 %v82, %v480
  %482 = vmatmul.f32.gmra.mxu0 %v271
  %v483 = vpop.f32.mrf.mxu0
  %v484 = vadd.f32 %v82, %v483
  %485 = vmatmul.f32.gmra.mxu0 %v274
  %v486 = vpop.f32.mrf.mxu0
  %v487 = vadd.f32 %v82, %v486
  %488 = vdwg.mxu0
  %vm489 = vcmask 261120
  %v490 = vsel %vm489, %v298, 0.0
  %491 = vadd.xlane.f32.xlu0 %v490
  %v492 = vpop.xlane.xlu0 %491
  %v493 = vsel %vm489, %v301, 0.0
  %494 = vadd.xlane.f32.xlu0 %v493
  %v495 = vpop.xlane.xlu0 %494
  %v496 = vsel %vm489, %v304, 0.0
  %497 = vadd.xlane.f32.xlu0 %v496
  %v498 = vpop.xlane.xlu0 %497
  %v499 = vsel %vm489, %v307, 0.0
  %500 = vadd.xlane.f32.xlu0 %v499
  %v501 = vpop.xlane.xlu0 %500
  %v502 = vsel %vm489, %v310, 0.0
  %503 = vadd.xlane.f32.xlu0 %v502
  %v504 = vpop.xlane.xlu0 %503
  %v505 = vsel %vm489, %v313, 0.0
  %506 = vadd.xlane.f32.xlu0 %v505
  %v507 = vpop.xlane.xlu0 %506
  %v508 = vsel %vm489, %v316, 0.0
  %509 = vadd.xlane.f32.xlu0 %v508
  %v510 = vpop.xlane.xlu0 %509
  %v511 = vsel %vm489, %v319, 0.0
  %512 = vadd.xlane.f32.xlu0 %v511
  %v513 = vpop.xlane.xlu0 %512
  %v514 = vsel %vm489, %v322, 0.0
  %515 = vadd.xlane.f32.xlu0 %v514
  %v516 = vpop.xlane.xlu0 %515
  %v517 = vsel %vm489, %v325, 0.0
  %518 = vadd.xlane.f32.xlu0 %v517
  %v519 = vpop.xlane.xlu0 %518
  %v520 = vsel %vm489, %v328, 0.0
  %521 = vadd.xlane.f32.xlu0 %v520
  %v522 = vpop.xlane.xlu0 %521
  %v523 = vsel %vm489, %v331, 0.0
  %524 = vadd.xlane.f32.xlu0 %v523
  %v525 = vpop.xlane.xlu0 %524
  %v526 = vsel %vm489, %v334, 0.0
  %527 = vadd.xlane.f32.xlu0 %v526
  %v528 = vpop.xlane.xlu0 %527
  %v529 = vsel %vm489, %v337, 0.0
  %530 = vadd.xlane.f32.xlu0 %v529
  %v531 = vpop.xlane.xlu0 %530
  %v532 = vsel %vm489, %v340, 0.0
  %533 = vadd.xlane.f32.xlu0 %v532
  %v534 = vpop.xlane.xlu0 %533
  %v535 = vsel %vm489, %v343, 0.0
  %536 = vadd.xlane.f32.xlu0 %v535
  %v537 = vpop.xlane.xlu0 %536
  %v538 = vsel %vm489, %v346, 0.0
  %539 = vadd.xlane.f32.xlu0 %v538
  %v540 = vpop.xlane.xlu0 %539
  %v541 = vsel %vm489, %v349, 0.0
  %542 = vadd.xlane.f32.xlu0 %v541
  %v543 = vpop.xlane.xlu0 %542
  %v544 = vsel %vm489, %v352, 0.0
  %545 = vadd.xlane.f32.xlu0 %v544
  %v546 = vpop.xlane.xlu0 %545
  %v547 = vsel %vm489, %v355, 0.0
  %548 = vadd.xlane.f32.xlu0 %v547
  %v549 = vpop.xlane.xlu0 %548
  %v550 = vsel %vm489, %v358, 0.0
  %551 = vadd.xlane.f32.xlu0 %v550
  %v552 = vpop.xlane.xlu0 %551
  %v553 = vsel %vm489, %v361, 0.0
  %554 = vadd.xlane.f32.xlu0 %v553
  %v555 = vpop.xlane.xlu0 %554
  %v556 = vsel %vm489, %v364, 0.0
  %557 = vadd.xlane.f32.xlu0 %v556
  %v558 = vpop.xlane.xlu0 %557
  %v559 = vsel %vm489, %v367, 0.0
  %560 = vadd.xlane.f32.xlu0 %v559
  %v561 = vpop.xlane.xlu0 %560
  %v562 = vsel %vm489, %v370, 0.0
  %563 = vadd.xlane.f32.xlu0 %v562
  %v564 = vpop.xlane.xlu0 %563
  %v565 = vsel %vm489, %v373, 0.0
  %566 = vadd.xlane.f32.xlu0 %v565
  %v567 = vpop.xlane.xlu0 %566
  %v568 = vsel %vm489, %v376, 0.0
  %569 = vadd.xlane.f32.xlu0 %v568
  %v570 = vpop.xlane.xlu0 %569
  %v571 = vsel %vm489, %v379, 0.0
  %572 = vadd.xlane.f32.xlu0 %v571
  %v573 = vpop.xlane.xlu0 %572
  %v574 = vsel %vm489, %v382, 0.0
  %575 = vadd.xlane.f32.xlu0 %v574
  %v576 = vpop.xlane.xlu0 %575
  %v577 = vsel %vm489, %v385, 0.0
  %578 = vadd.xlane.f32.xlu0 %v577
  %v579 = vpop.xlane.xlu0 %578
  %v580 = vsel %vm489, %v388, 0.0
  %581 = vadd.xlane.f32.xlu0 %v580
  %v582 = vpop.xlane.xlu0 %581
  %v583 = vsel %vm489, %v391, 0.0
  %584 = vadd.xlane.f32.xlu0 %v583
  %v585 = vpop.xlane.xlu0 %584
  %v586 = vsel %vm489, %v394, 0.0
  %587 = vadd.xlane.f32.xlu0 %v586
  %v588 = vpop.xlane.xlu0 %587
  %v589 = vsel %vm489, %v397, 0.0
  %590 = vadd.xlane.f32.xlu0 %v589
  %v591 = vpop.xlane.xlu0 %590
  %v592 = vsel %vm489, %v400, 0.0
  %593 = vadd.xlane.f32.xlu0 %v592
  %v594 = vpop.xlane.xlu0 %593
  %v595 = vsel %vm489, %v403, 0.0
  %596 = vadd.xlane.f32.xlu0 %v595
  %v597 = vpop.xlane.xlu0 %596
  %v598 = vsel %vm489, %v406, 0.0
  %599 = vadd.xlane.f32.xlu0 %v598
  %v600 = vpop.xlane.xlu0 %599
  %v601 = vsel %vm489, %v409, 0.0
  %602 = vadd.xlane.f32.xlu0 %v601
  %v603 = vpop.xlane.xlu0 %602
  %v604 = vsel %vm489, %v412, 0.0
  %605 = vadd.xlane.f32.xlu0 %v604
  %v606 = vpop.xlane.xlu0 %605
  %v607 = vsel %vm489, %v415, 0.0
  %608 = vadd.xlane.f32.xlu0 %v607
  %v609 = vpop.xlane.xlu0 %608
  %v610 = vsel %vm489, %v418, 0.0
  %611 = vadd.xlane.f32.xlu0 %v610
  %v612 = vpop.xlane.xlu0 %611
  %v613 = vsel %vm489, %v421, 0.0
  %614 = vadd.xlane.f32.xlu0 %v613
  %v615 = vpop.xlane.xlu0 %614
  %v616 = vsel %vm489, %v424, 0.0
  %617 = vadd.xlane.f32.xlu0 %v616
  %v618 = vpop.xlane.xlu0 %617
  %v619 = vsel %vm489, %v427, 0.0
  %620 = vadd.xlane.f32.xlu0 %v619
  %v621 = vpop.xlane.xlu0 %620
  %v622 = vsel %vm489, %v430, 0.0
  %623 = vadd.xlane.f32.xlu0 %v622
  %v624 = vpop.xlane.xlu0 %623
  %v625 = vsel %vm489, %v433, 0.0
  %626 = vadd.xlane.f32.xlu0 %v625
  %v627 = vpop.xlane.xlu0 %626
  %v628 = vsel %vm489, %v436, 0.0
  %629 = vadd.xlane.f32.xlu0 %v628
  %v630 = vpop.xlane.xlu0 %629
  %v631 = vsel %vm489, %v439, 0.0
  %632 = vadd.xlane.f32.xlu0 %v631
  %v633 = vpop.xlane.xlu0 %632
  %v634 = vsel %vm489, %v442, 0.0
  %635 = vadd.xlane.f32.xlu0 %v634
  %v636 = vpop.xlane.xlu0 %635
  %v637 = vsel %vm489, %v445, 0.0
  %638 = vadd.xlane.f32.xlu0 %v637
  %v639 = vpop.xlane.xlu0 %638
  %v640 = vsel %vm489, %v448, 0.0
  %641 = vadd.xlane.f32.xlu0 %v640
  %v642 = vpop.xlane.xlu0 %641
  %v643 = vsel %vm489, %v451, 0.0
  %644 = vadd.xlane.f32.xlu0 %v643
  %v645 = vpop.xlane.xlu0 %644
  %v646 = vsel %vm489, %v454, 0.0
  %647 = vadd.xlane.f32.xlu0 %v646
  %v648 = vpop.xlane.xlu0 %647
  %v649 = vsel %vm489, %v457, 0.0
  %650 = vadd.xlane.f32.xlu0 %v649
  %v651 = vpop.xlane.xlu0 %650
  %v652 = vsel %vm489, %v460, 0.0
  %653 = vadd.xlane.f32.xlu0 %v652
  %v654 = vpop.xlane.xlu0 %653
  %v655 = vsel %vm489, %v463, 0.0
  %656 = vadd.xlane.f32.xlu0 %v655
  %v657 = vpop.xlane.xlu0 %656
  %v658 = vsel %vm489, %v466, 0.0
  %659 = vadd.xlane.f32.xlu0 %v658
  %v660 = vpop.xlane.xlu0 %659
  %v661 = vsel %vm489, %v469, 0.0
  %662 = vadd.xlane.f32.xlu0 %v661
  %v663 = vpop.xlane.xlu0 %662
  %v664 = vsel %vm489, %v472, 0.0
  %665 = vadd.xlane.f32.xlu0 %v664
  %v666 = vpop.xlane.xlu0 %665
  %v667 = vsel %vm489, %v475, 0.0
  %668 = vadd.xlane.f32.xlu0 %v667
  %v669 = vpop.xlane.xlu0 %668
  %v670 = vsel %vm489, %v478, 0.0
  %671 = vadd.xlane.f32.xlu0 %v670
  %v672 = vpop.xlane.xlu0 %671
  %v673 = vsel %vm489, %v481, 0.0
  %674 = vadd.xlane.f32.xlu0 %v673
  %v675 = vpop.xlane.xlu0 %674
  %v676 = vsel %vm489, %v484, 0.0
  %677 = vadd.xlane.f32.xlu0 %v676
  %v678 = vpop.xlane.xlu0 %677
  %v679 = vsel %vm489, %v487, 0.0
  %680 = vadd.xlane.f32.xlu0 %v679
  %v681 = vpop.xlane.xlu0 %680
  %v682 = vmul.f32 %v492, 0.03125
  %v683 = vmul.f32 %v495, 0.03125
  %v684 = vmul.f32 %v498, 0.03125
  %v685 = vmul.f32 %v501, 0.03125
  %v686 = vmul.f32 %v504, 0.03125
  %v687 = vmul.f32 %v507, 0.03125
  %v688 = vmul.f32 %v510, 0.03125
  %v689 = vmul.f32 %v513, 0.03125
  %v690 = vmul.f32 %v516, 0.03125
  %v691 = vmul.f32 %v519, 0.03125
  %v692 = vmul.f32 %v522, 0.03125
  %v693 = vmul.f32 %v525, 0.03125
  %v694 = vmul.f32 %v528, 0.03125
  %v695 = vmul.f32 %v531, 0.03125
  %v696 = vmul.f32 %v534, 0.03125
  %v697 = vmul.f32 %v537, 0.03125
  %v698 = vmul.f32 %v540, 0.03125
  %v699 = vmul.f32 %v543, 0.03125
  %v700 = vmul.f32 %v546, 0.03125
  %v701 = vmul.f32 %v549, 0.03125
  %v702 = vmul.f32 %v552, 0.03125
  %v703 = vmul.f32 %v555, 0.03125
  %v704 = vmul.f32 %v558, 0.03125
  %v705 = vmul.f32 %v561, 0.03125
  %v706 = vmul.f32 %v564, 0.03125
  %v707 = vmul.f32 %v567, 0.03125
  %v708 = vmul.f32 %v570, 0.03125
  %v709 = vmul.f32 %v573, 0.03125
  %v710 = vmul.f32 %v576, 0.03125
  %v711 = vmul.f32 %v579, 0.03125
  %v712 = vmul.f32 %v582, 0.03125
  %v713 = vmul.f32 %v585, 0.03125
  %v714 = vmul.f32 %v588, 0.03125
  %v715 = vmul.f32 %v591, 0.03125
  %v716 = vmul.f32 %v594, 0.03125
  %v717 = vmul.f32 %v597, 0.03125
  %v718 = vmul.f32 %v600, 0.03125
  %v719 = vmul.f32 %v603, 0.03125
  %v720 = vmul.f32 %v606, 0.03125
  %v721 = vmul.f32 %v609, 0.03125
  %v722 = vmul.f32 %v612, 0.03125
  %v723 = vmul.f32 %v615, 0.03125
  %v724 = vmul.f32 %v618, 0.03125
  %v725 = vmul.f32 %v621, 0.03125
  %v726 = vmul.f32 %v624, 0.03125
  %v727 = vmul.f32 %v627, 0.03125
  %v728 = vmul.f32 %v630, 0.03125
  %v729 = vmul.f32 %v633, 0.03125
  %v730 = vmul.f32 %v636, 0.03125
  %v731 = vmul.f32 %v639, 0.03125
  %v732 = vmul.f32 %v642, 0.03125
  %v733 = vmul.f32 %v645, 0.03125
  %v734 = vmul.f32 %v648, 0.03125
  %v735 = vmul.f32 %v651, 0.03125
  %v736 = vmul.f32 %v654, 0.03125
  %v737 = vmul.f32 %v657, 0.03125
  %v738 = vmul.f32 %v660, 0.03125
  %v739 = vmul.f32 %v663, 0.03125
  %v740 = vmul.f32 %v666, 0.03125
  %v741 = vmul.f32 %v669, 0.03125
  %v742 = vmul.f32 %v672, 0.03125
  %v743 = vmul.f32 %v675, 0.03125
  %v744 = vmul.f32 %v678, 0.03125
  %v745 = vmul.f32 %v681, 0.03125
  %v746 = vmul.f32 %v298, %v298
  %v747 = vmul.f32 %v301, %v301
  %v748 = vmul.f32 %v304, %v304
  %v749 = vmul.f32 %v307, %v307
  %v750 = vmul.f32 %v310, %v310
  %v751 = vmul.f32 %v313, %v313
  %v752 = vmul.f32 %v316, %v316
  %v753 = vmul.f32 %v319, %v319
  %v754 = vmul.f32 %v322, %v322
  %v755 = vmul.f32 %v325, %v325
  %v756 = vmul.f32 %v328, %v328
  %v757 = vmul.f32 %v331, %v331
  %v758 = vmul.f32 %v334, %v334
  %v759 = vmul.f32 %v337, %v337
  %v760 = vmul.f32 %v340, %v340
  %v761 = vmul.f32 %v343, %v343
  %v762 = vmul.f32 %v346, %v346
  %v763 = vmul.f32 %v349, %v349
  %v764 = vmul.f32 %v352, %v352
  %v765 = vmul.f32 %v355, %v355
  %v766 = vmul.f32 %v358, %v358
  %v767 = vmul.f32 %v361, %v361
  %v768 = vmul.f32 %v364, %v364
  %v769 = vmul.f32 %v367, %v367
  %v770 = vmul.f32 %v370, %v370
  %v771 = vmul.f32 %v373, %v373
  %v772 = vmul.f32 %v376, %v376
  %v773 = vmul.f32 %v379, %v379
  %v774 = vmul.f32 %v382, %v382
  %v775 = vmul.f32 %v385, %v385
  %v776 = vmul.f32 %v388, %v388
  %v777 = vmul.f32 %v391, %v391
  %v778 = vmul.f32 %v394, %v394
  %v779 = vmul.f32 %v397, %v397
  %v780 = vmul.f32 %v400, %v400
  %v781 = vmul.f32 %v403, %v403
  %v782 = vmul.f32 %v406, %v406
  %v783 = vmul.f32 %v409, %v409
  %v784 = vmul.f32 %v412, %v412
  %v785 = vmul.f32 %v415, %v415
  %v786 = vmul.f32 %v418, %v418
  %v787 = vmul.f32 %v421, %v421
  %v788 = vmul.f32 %v424, %v424
  %v789 = vmul.f32 %v427, %v427
  %v790 = vmul.f32 %v430, %v430
  %v791 = vmul.f32 %v433, %v433
  %v792 = vmul.f32 %v436, %v436
  %v793 = vmul.f32 %v439, %v439
  %v794 = vmul.f32 %v442, %v442
  %v795 = vmul.f32 %v445, %v445
  %v796 = vmul.f32 %v448, %v448
  %v797 = vmul.f32 %v451, %v451
  %v798 = vmul.f32 %v454, %v454
  %v799 = vmul.f32 %v457, %v457
  %v800 = vmul.f32 %v460, %v460
  %v801 = vmul.f32 %v463, %v463
  %v802 = vmul.f32 %v466, %v466
  %v803 = vmul.f32 %v469, %v469
  %v804 = vmul.f32 %v472, %v472
  %v805 = vmul.f32 %v475, %v475
  %v806 = vmul.f32 %v478, %v478
  %v807 = vmul.f32 %v481, %v481
  %v808 = vmul.f32 %v484, %v484
  %v809 = vmul.f32 %v487, %v487
  %v810 = vsel %vm489, %v746, 0.0
  %811 = vadd.xlane.f32.xlu0 %v810
  %v812 = vpop.xlane.xlu0 %811
  %v813 = vsel %vm489, %v747, 0.0
  %814 = vadd.xlane.f32.xlu0 %v813
  %v815 = vpop.xlane.xlu0 %814
  %v816 = vsel %vm489, %v748, 0.0
  %817 = vadd.xlane.f32.xlu0 %v816
  %v818 = vpop.xlane.xlu0 %817
  %v819 = vsel %vm489, %v749, 0.0
  %820 = vadd.xlane.f32.xlu0 %v819
  %v821 = vpop.xlane.xlu0 %820
  %v822 = vsel %vm489, %v750, 0.0
  %823 = vadd.xlane.f32.xlu0 %v822
  %v824 = vpop.xlane.xlu0 %823
  %v825 = vsel %vm489, %v751, 0.0
  %826 = vadd.xlane.f32.xlu0 %v825
  %v827 = vpop.xlane.xlu0 %826
  %v828 = vsel %vm489, %v752, 0.0
  %829 = vadd.xlane.f32.xlu0 %v828
  %v830 = vpop.xlane.xlu0 %829
  %v831 = vsel %vm489, %v753, 0.0
  %832 = vadd.xlane.f32.xlu0 %v831
  %v833 = vpop.xlane.xlu0 %832
  %v834 = vsel %vm489, %v754, 0.0
  %835 = vadd.xlane.f32.xlu0 %v834
  %v836 = vpop.xlane.xlu0 %835
  %v837 = vsel %vm489, %v755, 0.0
  %838 = vadd.xlane.f32.xlu0 %v837
  %v839 = vpop.xlane.xlu0 %838
  %v840 = vsel %vm489, %v756, 0.0
  %841 = vadd.xlane.f32.xlu0 %v840
  %v842 = vpop.xlane.xlu0 %841
  %v843 = vsel %vm489, %v757, 0.0
  %844 = vadd.xlane.f32.xlu0 %v843
  %v845 = vpop.xlane.xlu0 %844
  %v846 = vsel %vm489, %v758, 0.0
  %847 = vadd.xlane.f32.xlu0 %v846
  %v848 = vpop.xlane.xlu0 %847
  %v849 = vsel %vm489, %v759, 0.0
  %850 = vadd.xlane.f32.xlu0 %v849
  %v851 = vpop.xlane.xlu0 %850
  %v852 = vsel %vm489, %v760, 0.0
  %853 = vadd.xlane.f32.xlu0 %v852
  %v854 = vpop.xlane.xlu0 %853
  %v855 = vsel %vm489, %v761, 0.0
  %856 = vadd.xlane.f32.xlu0 %v855
  %v857 = vpop.xlane.xlu0 %856
  %v858 = vsel %vm489, %v762, 0.0
  %859 = vadd.xlane.f32.xlu0 %v858
  %v860 = vpop.xlane.xlu0 %859
  %v861 = vsel %vm489, %v763, 0.0
  %862 = vadd.xlane.f32.xlu0 %v861
  %v863 = vpop.xlane.xlu0 %862
  %v864 = vsel %vm489, %v764, 0.0
  %865 = vadd.xlane.f32.xlu0 %v864
  %v866 = vpop.xlane.xlu0 %865
  %v867 = vsel %vm489, %v765, 0.0
  %868 = vadd.xlane.f32.xlu0 %v867
  %v869 = vpop.xlane.xlu0 %868
  %v870 = vsel %vm489, %v766, 0.0
  %871 = vadd.xlane.f32.xlu0 %v870
  %v872 = vpop.xlane.xlu0 %871
  %v873 = vsel %vm489, %v767, 0.0
  %874 = vadd.xlane.f32.xlu0 %v873
  %v875 = vpop.xlane.xlu0 %874
  %v876 = vsel %vm489, %v768, 0.0
  %877 = vadd.xlane.f32.xlu0 %v876
  %v878 = vpop.xlane.xlu0 %877
  %v879 = vsel %vm489, %v769, 0.0
  %880 = vadd.xlane.f32.xlu0 %v879
  %v881 = vpop.xlane.xlu0 %880
  %v882 = vsel %vm489, %v770, 0.0
  %883 = vadd.xlane.f32.xlu0 %v882
  %v884 = vpop.xlane.xlu0 %883
  %v885 = vsel %vm489, %v771, 0.0
  %886 = vadd.xlane.f32.xlu0 %v885
  %v887 = vpop.xlane.xlu0 %886
  %v888 = vsel %vm489, %v772, 0.0
  %889 = vadd.xlane.f32.xlu0 %v888
  %v890 = vpop.xlane.xlu0 %889
  %v891 = vsel %vm489, %v773, 0.0
  %892 = vadd.xlane.f32.xlu0 %v891
  %v893 = vpop.xlane.xlu0 %892
  %v894 = vsel %vm489, %v774, 0.0
  %895 = vadd.xlane.f32.xlu0 %v894
  %v896 = vpop.xlane.xlu0 %895
  %v897 = vsel %vm489, %v775, 0.0
  %898 = vadd.xlane.f32.xlu0 %v897
  %v899 = vpop.xlane.xlu0 %898
  %v900 = vsel %vm489, %v776, 0.0
  %901 = vadd.xlane.f32.xlu0 %v900
  %v902 = vpop.xlane.xlu0 %901
  %v903 = vsel %vm489, %v777, 0.0
  %904 = vadd.xlane.f32.xlu0 %v903
  %v905 = vpop.xlane.xlu0 %904
  %v906 = vsel %vm489, %v778, 0.0
  %907 = vadd.xlane.f32.xlu0 %v906
  %v908 = vpop.xlane.xlu0 %907
  %v909 = vsel %vm489, %v779, 0.0
  %910 = vadd.xlane.f32.xlu0 %v909
  %v911 = vpop.xlane.xlu0 %910
  %v912 = vsel %vm489, %v780, 0.0
  %913 = vadd.xlane.f32.xlu0 %v912
  %v914 = vpop.xlane.xlu0 %913
  %v915 = vsel %vm489, %v781, 0.0
  %916 = vadd.xlane.f32.xlu0 %v915
  %v917 = vpop.xlane.xlu0 %916
  %v918 = vsel %vm489, %v782, 0.0
  %919 = vadd.xlane.f32.xlu0 %v918
  %v920 = vpop.xlane.xlu0 %919
  %v921 = vsel %vm489, %v783, 0.0
  %922 = vadd.xlane.f32.xlu0 %v921
  %v923 = vpop.xlane.xlu0 %922
  %v924 = vsel %vm489, %v784, 0.0
  %925 = vadd.xlane.f32.xlu0 %v924
  %v926 = vpop.xlane.xlu0 %925
  %v927 = vsel %vm489, %v785, 0.0
  %928 = vadd.xlane.f32.xlu0 %v927
  %v929 = vpop.xlane.xlu0 %928
  %v930 = vsel %vm489, %v786, 0.0
  %931 = vadd.xlane.f32.xlu0 %v930
  %v932 = vpop.xlane.xlu0 %931
  %v933 = vsel %vm489, %v787, 0.0
  %934 = vadd.xlane.f32.xlu0 %v933
  %v935 = vpop.xlane.xlu0 %934
  %v936 = vsel %vm489, %v788, 0.0
  %937 = vadd.xlane.f32.xlu0 %v936
  %v938 = vpop.xlane.xlu0 %937
  %v939 = vsel %vm489, %v789, 0.0
  %940 = vadd.xlane.f32.xlu0 %v939
  %v941 = vpop.xlane.xlu0 %940
  %v942 = vsel %vm489, %v790, 0.0
  %943 = vadd.xlane.f32.xlu0 %v942
  %v944 = vpop.xlane.xlu0 %943
  %v945 = vsel %vm489, %v791, 0.0
  %946 = vadd.xlane.f32.xlu0 %v945
  %v947 = vpop.xlane.xlu0 %946
  %v948 = vsel %vm489, %v792, 0.0
  %949 = vadd.xlane.f32.xlu0 %v948
  %v950 = vpop.xlane.xlu0 %949
  %v951 = vsel %vm489, %v793, 0.0
  %952 = vadd.xlane.f32.xlu0 %v951
  %v953 = vpop.xlane.xlu0 %952
  %v954 = vsel %vm489, %v794, 0.0
  %955 = vadd.xlane.f32.xlu0 %v954
  %v956 = vpop.xlane.xlu0 %955
  %v957 = vsel %vm489, %v795, 0.0
  %958 = vadd.xlane.f32.xlu0 %v957
  %v959 = vpop.xlane.xlu0 %958
  %v960 = vsel %vm489, %v796, 0.0
  %961 = vadd.xlane.f32.xlu0 %v960
  %v962 = vpop.xlane.xlu0 %961
  %v963 = vsel %vm489, %v797, 0.0
  %964 = vadd.xlane.f32.xlu0 %v963
  %v965 = vpop.xlane.xlu0 %964
  %v966 = vsel %vm489, %v798, 0.0
  %967 = vadd.xlane.f32.xlu0 %v966
  %v968 = vpop.xlane.xlu0 %967
  %v969 = vsel %vm489, %v799, 0.0
  %970 = vadd.xlane.f32.xlu0 %v969
  %v971 = vpop.xlane.xlu0 %970
  %v972 = vsel %vm489, %v800, 0.0
  %973 = vadd.xlane.f32.xlu0 %v972
  %v974 = vpop.xlane.xlu0 %973
  %v975 = vsel %vm489, %v801, 0.0
  %976 = vadd.xlane.f32.xlu0 %v975
  %v977 = vpop.xlane.xlu0 %976
  %v978 = vsel %vm489, %v802, 0.0
  %979 = vadd.xlane.f32.xlu0 %v978
  %v980 = vpop.xlane.xlu0 %979
  %v981 = vsel %vm489, %v803, 0.0
  %982 = vadd.xlane.f32.xlu0 %v981
  %v983 = vpop.xlane.xlu0 %982
  %v984 = vsel %vm489, %v804, 0.0
  %985 = vadd.xlane.f32.xlu0 %v984
  %v986 = vpop.xlane.xlu0 %985
  %v987 = vsel %vm489, %v805, 0.0
  %988 = vadd.xlane.f32.xlu0 %v987
  %v989 = vpop.xlane.xlu0 %988
  %v990 = vsel %vm489, %v806, 0.0
  %991 = vadd.xlane.f32.xlu0 %v990
  %v992 = vpop.xlane.xlu0 %991
  %v993 = vsel %vm489, %v807, 0.0
  %994 = vadd.xlane.f32.xlu0 %v993
  %v995 = vpop.xlane.xlu0 %994
  %v996 = vsel %vm489, %v808, 0.0
  %997 = vadd.xlane.f32.xlu0 %v996
  %v998 = vpop.xlane.xlu0 %997
  %v999 = vsel %vm489, %v809, 0.0
  %1000 = vadd.xlane.f32.xlu0 %v999
  %v1001 = vpop.xlane.xlu0 %1000
  %v1002 = vmul.f32 %v812, 0.03125
  %v1003 = vmul.f32 %v815, 0.03125
  %v1004 = vmul.f32 %v818, 0.03125
  %v1005 = vmul.f32 %v821, 0.03125
  %v1006 = vmul.f32 %v824, 0.03125
  %v1007 = vmul.f32 %v827, 0.03125
  %v1008 = vmul.f32 %v830, 0.03125
  %v1009 = vmul.f32 %v833, 0.03125
  %v1010 = vmul.f32 %v836, 0.03125
  %v1011 = vmul.f32 %v839, 0.03125
  %v1012 = vmul.f32 %v842, 0.03125
  %v1013 = vmul.f32 %v845, 0.03125
  %v1014 = vmul.f32 %v848, 0.03125
  %v1015 = vmul.f32 %v851, 0.03125
  %v1016 = vmul.f32 %v854, 0.03125
  %v1017 = vmul.f32 %v857, 0.03125
  %v1018 = vmul.f32 %v860, 0.03125
  %v1019 = vmul.f32 %v863, 0.03125
  %v1020 = vmul.f32 %v866, 0.03125
  %v1021 = vmul.f32 %v869, 0.03125
  %v1022 = vmul.f32 %v872, 0.03125
  %v1023 = vmul.f32 %v875, 0.03125
  %v1024 = vmul.f32 %v878, 0.03125
  %v1025 = vmul.f32 %v881, 0.03125
  %v1026 = vmul.f32 %v884, 0.03125
  %v1027 = vmul.f32 %v887, 0.03125
  %v1028 = vmul.f32 %v890, 0.03125
  %v1029 = vmul.f32 %v893, 0.03125
  %v1030 = vmul.f32 %v896, 0.03125
  %v1031 = vmul.f32 %v899, 0.03125
  %v1032 = vmul.f32 %v902, 0.03125
  %v1033 = vmul.f32 %v905, 0.03125
  %v1034 = vmul.f32 %v908, 0.03125
  %v1035 = vmul.f32 %v911, 0.03125
  %v1036 = vmul.f32 %v914, 0.03125
  %v1037 = vmul.f32 %v917, 0.03125
  %v1038 = vmul.f32 %v920, 0.03125
  %v1039 = vmul.f32 %v923, 0.03125
  %v1040 = vmul.f32 %v926, 0.03125
  %v1041 = vmul.f32 %v929, 0.03125
  %v1042 = vmul.f32 %v932, 0.03125
  %v1043 = vmul.f32 %v935, 0.03125
  %v1044 = vmul.f32 %v938, 0.03125
  %v1045 = vmul.f32 %v941, 0.03125
  %v1046 = vmul.f32 %v944, 0.03125
  %v1047 = vmul.f32 %v947, 0.03125
  %v1048 = vmul.f32 %v950, 0.03125
  %v1049 = vmul.f32 %v953, 0.03125
  %v1050 = vmul.f32 %v956, 0.03125
  %v1051 = vmul.f32 %v959, 0.03125
  %v1052 = vmul.f32 %v962, 0.03125
  %v1053 = vmul.f32 %v965, 0.03125
  %v1054 = vmul.f32 %v968, 0.03125
  %v1055 = vmul.f32 %v971, 0.03125
  %v1056 = vmul.f32 %v974, 0.03125
  %v1057 = vmul.f32 %v977, 0.03125
  %v1058 = vmul.f32 %v980, 0.03125
  %v1059 = vmul.f32 %v983, 0.03125
  %v1060 = vmul.f32 %v986, 0.03125
  %v1061 = vmul.f32 %v989, 0.03125
  %v1062 = vmul.f32 %v992, 0.03125
  %v1063 = vmul.f32 %v995, 0.03125
  %v1064 = vmul.f32 %v998, 0.03125
  %v1065 = vmul.f32 %v1001, 0.03125
  %v1066 = vmul.f32 %v682, %v682
  %v1067 = vmul.f32 %v683, %v683
  %v1068 = vmul.f32 %v684, %v684
  %v1069 = vmul.f32 %v685, %v685
  %v1070 = vmul.f32 %v686, %v686
  %v1071 = vmul.f32 %v687, %v687
  %v1072 = vmul.f32 %v688, %v688
  %v1073 = vmul.f32 %v689, %v689
  %v1074 = vmul.f32 %v690, %v690
  %v1075 = vmul.f32 %v691, %v691
  %v1076 = vmul.f32 %v692, %v692
  %v1077 = vmul.f32 %v693, %v693
  %v1078 = vmul.f32 %v694, %v694
  %v1079 = vmul.f32 %v695, %v695
  %v1080 = vmul.f32 %v696, %v696
  %v1081 = vmul.f32 %v697, %v697
  %v1082 = vmul.f32 %v698, %v698
  %v1083 = vmul.f32 %v699, %v699
  %v1084 = vmul.f32 %v700, %v700
  %v1085 = vmul.f32 %v701, %v701
  %v1086 = vmul.f32 %v702, %v702
  %v1087 = vmul.f32 %v703, %v703
  %v1088 = vmul.f32 %v704, %v704
  %v1089 = vmul.f32 %v705, %v705
  %v1090 = vmul.f32 %v706, %v706
  %v1091 = vmul.f32 %v707, %v707
  %v1092 = vmul.f32 %v708, %v708
  %v1093 = vmul.f32 %v709, %v709
  %v1094 = vmul.f32 %v710, %v710
  %v1095 = vmul.f32 %v711, %v711
  %v1096 = vmul.f32 %v712, %v712
  %v1097 = vmul.f32 %v713, %v713
  %v1098 = vmul.f32 %v714, %v714
  %v1099 = vmul.f32 %v715, %v715
  %v1100 = vmul.f32 %v716, %v716
  %v1101 = vmul.f32 %v717, %v717
  %v1102 = vmul.f32 %v718, %v718
  %v1103 = vmul.f32 %v719, %v719
  %v1104 = vmul.f32 %v720, %v720
  %v1105 = vmul.f32 %v721, %v721
  %v1106 = vmul.f32 %v722, %v722
  %v1107 = vmul.f32 %v723, %v723
  %v1108 = vmul.f32 %v724, %v724
  %v1109 = vmul.f32 %v725, %v725
  %v1110 = vmul.f32 %v726, %v726
  %v1111 = vmul.f32 %v727, %v727
  %v1112 = vmul.f32 %v728, %v728
  %v1113 = vmul.f32 %v729, %v729
  %v1114 = vmul.f32 %v730, %v730
  %v1115 = vmul.f32 %v731, %v731
  %v1116 = vmul.f32 %v732, %v732
  %v1117 = vmul.f32 %v733, %v733
  %v1118 = vmul.f32 %v734, %v734
  %v1119 = vmul.f32 %v735, %v735
  %v1120 = vmul.f32 %v736, %v736
  %v1121 = vmul.f32 %v737, %v737
  %v1122 = vmul.f32 %v738, %v738
  %v1123 = vmul.f32 %v739, %v739
  %v1124 = vmul.f32 %v740, %v740
  %v1125 = vmul.f32 %v741, %v741
  %v1126 = vmul.f32 %v742, %v742
  %v1127 = vmul.f32 %v743, %v743
  %v1128 = vmul.f32 %v744, %v744
  %v1129 = vmul.f32 %v745, %v745
  %v1130 = vsub.f32 %v1002, %v1066
  %v1131 = vsub.f32 %v1003, %v1067
  %v1132 = vsub.f32 %v1004, %v1068
  %v1133 = vsub.f32 %v1005, %v1069
  %v1134 = vsub.f32 %v1006, %v1070
  %v1135 = vsub.f32 %v1007, %v1071
  %v1136 = vsub.f32 %v1008, %v1072
  %v1137 = vsub.f32 %v1009, %v1073
  %v1138 = vsub.f32 %v1010, %v1074
  %v1139 = vsub.f32 %v1011, %v1075
  %v1140 = vsub.f32 %v1012, %v1076
  %v1141 = vsub.f32 %v1013, %v1077
  %v1142 = vsub.f32 %v1014, %v1078
  %v1143 = vsub.f32 %v1015, %v1079
  %v1144 = vsub.f32 %v1016, %v1080
  %v1145 = vsub.f32 %v1017, %v1081
  %v1146 = vsub.f32 %v1018, %v1082
  %v1147 = vsub.f32 %v1019, %v1083
  %v1148 = vsub.f32 %v1020, %v1084
  %v1149 = vsub.f32 %v1021, %v1085
  %v1150 = vsub.f32 %v1022, %v1086
  %v1151 = vsub.f32 %v1023, %v1087
  %v1152 = vsub.f32 %v1024, %v1088
  %v1153 = vsub.f32 %v1025, %v1089
  %v1154 = vsub.f32 %v1026, %v1090
  %v1155 = vsub.f32 %v1027, %v1091
  %v1156 = vsub.f32 %v1028, %v1092
  %v1157 = vsub.f32 %v1029, %v1093
  %v1158 = vsub.f32 %v1030, %v1094
  %v1159 = vsub.f32 %v1031, %v1095
  %v1160 = vsub.f32 %v1032, %v1096
  %v1161 = vsub.f32 %v1033, %v1097
  %v1162 = vsub.f32 %v1034, %v1098
  %v1163 = vsub.f32 %v1035, %v1099
  %v1164 = vsub.f32 %v1036, %v1100
  %v1165 = vsub.f32 %v1037, %v1101
  %v1166 = vsub.f32 %v1038, %v1102
  %v1167 = vsub.f32 %v1039, %v1103
  %v1168 = vsub.f32 %v1040, %v1104
  %v1169 = vsub.f32 %v1041, %v1105
  %v1170 = vsub.f32 %v1042, %v1106
  %v1171 = vsub.f32 %v1043, %v1107
  %v1172 = vsub.f32 %v1044, %v1108
  %v1173 = vsub.f32 %v1045, %v1109
  %v1174 = vsub.f32 %v1046, %v1110
  %v1175 = vsub.f32 %v1047, %v1111
  %v1176 = vsub.f32 %v1048, %v1112
  %v1177 = vsub.f32 %v1049, %v1113
  %v1178 = vsub.f32 %v1050, %v1114
  %v1179 = vsub.f32 %v1051, %v1115
  %v1180 = vsub.f32 %v1052, %v1116
  %v1181 = vsub.f32 %v1053, %v1117
  %v1182 = vsub.f32 %v1054, %v1118
  %v1183 = vsub.f32 %v1055, %v1119
  %v1184 = vsub.f32 %v1056, %v1120
  %v1185 = vsub.f32 %v1057, %v1121
  %v1186 = vsub.f32 %v1058, %v1122
  %v1187 = vsub.f32 %v1059, %v1123
  %v1188 = vsub.f32 %v1060, %v1124
  %v1189 = vsub.f32 %v1061, %v1125
  %v1190 = vsub.f32 %v1062, %v1126
  %v1191 = vsub.f32 %v1063, %v1127
  %v1192 = vsub.f32 %v1064, %v1128
  %v1193 = vsub.f32 %v1065, %v1129
  %v1194 = vadd.f32 %v1130, 1e-05
  %v1195 = vadd.f32 %v1131, 1e-05
  %v1196 = vadd.f32 %v1132, 1e-05
  %v1197 = vadd.f32 %v1133, 1e-05
  %v1198 = vadd.f32 %v1134, 1e-05
  %v1199 = vadd.f32 %v1135, 1e-05
  %v1200 = vadd.f32 %v1136, 1e-05
  %v1201 = vadd.f32 %v1137, 1e-05
  %v1202 = vadd.f32 %v1138, 1e-05
  %v1203 = vadd.f32 %v1139, 1e-05
  %v1204 = vadd.f32 %v1140, 1e-05
  %v1205 = vadd.f32 %v1141, 1e-05
  %v1206 = vadd.f32 %v1142, 1e-05
  %v1207 = vadd.f32 %v1143, 1e-05
  %v1208 = vadd.f32 %v1144, 1e-05
  %v1209 = vadd.f32 %v1145, 1e-05
  %v1210 = vadd.f32 %v1146, 1e-05
  %v1211 = vadd.f32 %v1147, 1e-05
  %v1212 = vadd.f32 %v1148, 1e-05
  %v1213 = vadd.f32 %v1149, 1e-05
  %v1214 = vadd.f32 %v1150, 1e-05
  %v1215 = vadd.f32 %v1151, 1e-05
  %v1216 = vadd.f32 %v1152, 1e-05
  %v1217 = vadd.f32 %v1153, 1e-05
  %v1218 = vadd.f32 %v1154, 1e-05
  %v1219 = vadd.f32 %v1155, 1e-05
  %v1220 = vadd.f32 %v1156, 1e-05
  %v1221 = vadd.f32 %v1157, 1e-05
  %v1222 = vadd.f32 %v1158, 1e-05
  %v1223 = vadd.f32 %v1159, 1e-05
  %v1224 = vadd.f32 %v1160, 1e-05
  %v1225 = vadd.f32 %v1161, 1e-05
  %v1226 = vadd.f32 %v1162, 1e-05
  %v1227 = vadd.f32 %v1163, 1e-05
  %v1228 = vadd.f32 %v1164, 1e-05
  %v1229 = vadd.f32 %v1165, 1e-05
  %v1230 = vadd.f32 %v1166, 1e-05
  %v1231 = vadd.f32 %v1167, 1e-05
  %v1232 = vadd.f32 %v1168, 1e-05
  %v1233 = vadd.f32 %v1169, 1e-05
  %v1234 = vadd.f32 %v1170, 1e-05
  %v1235 = vadd.f32 %v1171, 1e-05
  %v1236 = vadd.f32 %v1172, 1e-05
  %v1237 = vadd.f32 %v1173, 1e-05
  %v1238 = vadd.f32 %v1174, 1e-05
  %v1239 = vadd.f32 %v1175, 1e-05
  %v1240 = vadd.f32 %v1176, 1e-05
  %v1241 = vadd.f32 %v1177, 1e-05
  %v1242 = vadd.f32 %v1178, 1e-05
  %v1243 = vadd.f32 %v1179, 1e-05
  %v1244 = vadd.f32 %v1180, 1e-05
  %v1245 = vadd.f32 %v1181, 1e-05
  %v1246 = vadd.f32 %v1182, 1e-05
  %v1247 = vadd.f32 %v1183, 1e-05
  %v1248 = vadd.f32 %v1184, 1e-05
  %v1249 = vadd.f32 %v1185, 1e-05
  %v1250 = vadd.f32 %v1186, 1e-05
  %v1251 = vadd.f32 %v1187, 1e-05
  %v1252 = vadd.f32 %v1188, 1e-05
  %v1253 = vadd.f32 %v1189, 1e-05
  %v1254 = vadd.f32 %v1190, 1e-05
  %v1255 = vadd.f32 %v1191, 1e-05
  %v1256 = vadd.f32 %v1192, 1e-05
  %v1257 = vadd.f32 %v1193, 1e-05
  %v1258 = vrsqrt.pop %v1194
  %v1259 = vmul.f32 %v1258, %v1194
  %v1260 = vmul.f32 %v1259, %v1258
  %v1261 = vmul.f32 0.5, %v1260
  %v1262 = vsub.f32 1.5, %v1261
  %v1263 = vmul.f32 %v1258, %v1262
  %vm1264 = vweird.f32 %v1194
  %vm1265 = vweird.f32 %v1258
  %vm1266 = vmor %vm1264, %vm1265
  %v1267 = vsel %vm1266, %v1258, %v1263
  %v1268 = vrsqrt.pop %v1195
  %v1269 = vmul.f32 %v1268, %v1195
  %v1270 = vmul.f32 %v1269, %v1268
  %v1271 = vmul.f32 0.5, %v1270
  %v1272 = vsub.f32 1.5, %v1271
  %v1273 = vmul.f32 %v1268, %v1272
  %vm1274 = vweird.f32 %v1195
  %vm1275 = vweird.f32 %v1268
  %vm1276 = vmor %vm1274, %vm1275
  %v1277 = vsel %vm1276, %v1268, %v1273
  %v1278 = vrsqrt.pop %v1196
  %v1279 = vmul.f32 %v1278, %v1196
  %v1280 = vmul.f32 %v1279, %v1278
  %v1281 = vmul.f32 0.5, %v1280
  %v1282 = vsub.f32 1.5, %v1281
  %v1283 = vmul.f32 %v1278, %v1282
  %vm1284 = vweird.f32 %v1196
  %vm1285 = vweird.f32 %v1278
  %vm1286 = vmor %vm1284, %vm1285
  %v1287 = vsel %vm1286, %v1278, %v1283
  %v1288 = vrsqrt.pop %v1197
  %v1289 = vmul.f32 %v1288, %v1197
  %v1290 = vmul.f32 %v1289, %v1288
  %v1291 = vmul.f32 0.5, %v1290
  %v1292 = vsub.f32 1.5, %v1291
  %v1293 = vmul.f32 %v1288, %v1292
  %vm1294 = vweird.f32 %v1197
  %vm1295 = vweird.f32 %v1288
  %vm1296 = vmor %vm1294, %vm1295
  %v1297 = vsel %vm1296, %v1288, %v1293
  %v1298 = vrsqrt.pop %v1198
  %v1299 = vmul.f32 %v1298, %v1198
  %v1300 = vmul.f32 %v1299, %v1298
  %v1301 = vmul.f32 0.5, %v1300
  %v1302 = vsub.f32 1.5, %v1301
  %v1303 = vmul.f32 %v1298, %v1302
  %vm1304 = vweird.f32 %v1198
  %vm1305 = vweird.f32 %v1298
  %vm1306 = vmor %vm1304, %vm1305
  %v1307 = vsel %vm1306, %v1298, %v1303
  %v1308 = vrsqrt.pop %v1199
  %v1309 = vmul.f32 %v1308, %v1199
  %v1310 = vmul.f32 %v1309, %v1308
  %v1311 = vmul.f32 0.5, %v1310
  %v1312 = vsub.f32 1.5, %v1311
  %v1313 = vmul.f32 %v1308, %v1312
  %vm1314 = vweird.f32 %v1199
  %vm1315 = vweird.f32 %v1308
  %vm1316 = vmor %vm1314, %vm1315
  %v1317 = vsel %vm1316, %v1308, %v1313
  %v1318 = vrsqrt.pop %v1200
  %v1319 = vmul.f32 %v1318, %v1200
  %v1320 = vmul.f32 %v1319, %v1318
  %v1321 = vmul.f32 0.5, %v1320
  %v1322 = vsub.f32 1.5, %v1321
  %v1323 = vmul.f32 %v1318, %v1322
  %vm1324 = vweird.f32 %v1200
  %vm1325 = vweird.f32 %v1318
  %vm1326 = vmor %vm1324, %vm1325
  %v1327 = vsel %vm1326, %v1318, %v1323
  %v1328 = vrsqrt.pop %v1201
  %v1329 = vmul.f32 %v1328, %v1201
  %v1330 = vmul.f32 %v1329, %v1328
  %v1331 = vmul.f32 0.5, %v1330
  %v1332 = vsub.f32 1.5, %v1331
  %v1333 = vmul.f32 %v1328, %v1332
  %vm1334 = vweird.f32 %v1201
  %vm1335 = vweird.f32 %v1328
  %vm1336 = vmor %vm1334, %vm1335
  %v1337 = vsel %vm1336, %v1328, %v1333
  %v1338 = vrsqrt.pop %v1202
  %v1339 = vmul.f32 %v1338, %v1202
  %v1340 = vmul.f32 %v1339, %v1338
  %v1341 = vmul.f32 0.5, %v1340
  %v1342 = vsub.f32 1.5, %v1341
  %v1343 = vmul.f32 %v1338, %v1342
  %vm1344 = vweird.f32 %v1202
  %vm1345 = vweird.f32 %v1338
  %vm1346 = vmor %vm1344, %vm1345
  %v1347 = vsel %vm1346, %v1338, %v1343
  %v1348 = vrsqrt.pop %v1203
  %v1349 = vmul.f32 %v1348, %v1203
  %v1350 = vmul.f32 %v1349, %v1348
  %v1351 = vmul.f32 0.5, %v1350
  %v1352 = vsub.f32 1.5, %v1351
  %v1353 = vmul.f32 %v1348, %v1352
  %vm1354 = vweird.f32 %v1203
  %vm1355 = vweird.f32 %v1348
  %vm1356 = vmor %vm1354, %vm1355
  %v1357 = vsel %vm1356, %v1348, %v1353
  %v1358 = vrsqrt.pop %v1204
  %v1359 = vmul.f32 %v1358, %v1204
  %v1360 = vmul.f32 %v1359, %v1358
  %v1361 = vmul.f32 0.5, %v1360
  %v1362 = vsub.f32 1.5, %v1361
  %v1363 = vmul.f32 %v1358, %v1362
  %vm1364 = vweird.f32 %v1204
  %vm1365 = vweird.f32 %v1358
  %vm1366 = vmor %vm1364, %vm1365
  %v1367 = vsel %vm1366, %v1358, %v1363
  %v1368 = vrsqrt.pop %v1205
  %v1369 = vmul.f32 %v1368, %v1205
  %v1370 = vmul.f32 %v1369, %v1368
  %v1371 = vmul.f32 0.5, %v1370
  %v1372 = vsub.f32 1.5, %v1371
  %v1373 = vmul.f32 %v1368, %v1372
  %vm1374 = vweird.f32 %v1205
  %vm1375 = vweird.f32 %v1368
  %vm1376 = vmor %vm1374, %vm1375
  %v1377 = vsel %vm1376, %v1368, %v1373
  %v1378 = vrsqrt.pop %v1206
  %v1379 = vmul.f32 %v1378, %v1206
  %v1380 = vmul.f32 %v1379, %v1378
  %v1381 = vmul.f32 0.5, %v1380
  %v1382 = vsub.f32 1.5, %v1381
  %v1383 = vmul.f32 %v1378, %v1382
  %vm1384 = vweird.f32 %v1206
  %vm1385 = vweird.f32 %v1378
  %vm1386 = vmor %vm1384, %vm1385
  %v1387 = vsel %vm1386, %v1378, %v1383
  %v1388 = vrsqrt.pop %v1207
  %v1389 = vmul.f32 %v1388, %v1207
  %v1390 = vmul.f32 %v1389, %v1388
  %v1391 = vmul.f32 0.5, %v1390
  %v1392 = vsub.f32 1.5, %v1391
  %v1393 = vmul.f32 %v1388, %v1392
  %vm1394 = vweird.f32 %v1207
  %vm1395 = vweird.f32 %v1388
  %vm1396 = vmor %vm1394, %vm1395
  %v1397 = vsel %vm1396, %v1388, %v1393
  %v1398 = vrsqrt.pop %v1208
  %v1399 = vmul.f32 %v1398, %v1208
  %v1400 = vmul.f32 %v1399, %v1398
  %v1401 = vmul.f32 0.5, %v1400
  %v1402 = vsub.f32 1.5, %v1401
  %v1403 = vmul.f32 %v1398, %v1402
  %vm1404 = vweird.f32 %v1208
  %vm1405 = vweird.f32 %v1398
  %vm1406 = vmor %vm1404, %vm1405
  %v1407 = vsel %vm1406, %v1398, %v1403
  %v1408 = vrsqrt.pop %v1209
  %v1409 = vmul.f32 %v1408, %v1209
  %v1410 = vmul.f32 %v1409, %v1408
  %v1411 = vmul.f32 0.5, %v1410
  %v1412 = vsub.f32 1.5, %v1411
  %v1413 = vmul.f32 %v1408, %v1412
  %vm1414 = vweird.f32 %v1209
  %vm1415 = vweird.f32 %v1408
  %vm1416 = vmor %vm1414, %vm1415
  %v1417 = vsel %vm1416, %v1408, %v1413
  %v1418 = vrsqrt.pop %v1210
  %v1419 = vmul.f32 %v1418, %v1210
  %v1420 = vmul.f32 %v1419, %v1418
  %v1421 = vmul.f32 0.5, %v1420
  %v1422 = vsub.f32 1.5, %v1421
  %v1423 = vmul.f32 %v1418, %v1422
  %vm1424 = vweird.f32 %v1210
  %vm1425 = vweird.f32 %v1418
  %vm1426 = vmor %vm1424, %vm1425
  %v1427 = vsel %vm1426, %v1418, %v1423
  %v1428 = vrsqrt.pop %v1211
  %v1429 = vmul.f32 %v1428, %v1211
  %v1430 = vmul.f32 %v1429, %v1428
  %v1431 = vmul.f32 0.5, %v1430
  %v1432 = vsub.f32 1.5, %v1431
  %v1433 = vmul.f32 %v1428, %v1432
  %vm1434 = vweird.f32 %v1211
  %vm1435 = vweird.f32 %v1428
  %vm1436 = vmor %vm1434, %vm1435
  %v1437 = vsel %vm1436, %v1428, %v1433
  %v1438 = vrsqrt.pop %v1212
  %v1439 = vmul.f32 %v1438, %v1212
  %v1440 = vmul.f32 %v1439, %v1438
  %v1441 = vmul.f32 0.5, %v1440
  %v1442 = vsub.f32 1.5, %v1441
  %v1443 = vmul.f32 %v1438, %v1442
  %vm1444 = vweird.f32 %v1212
  %vm1445 = vweird.f32 %v1438
  %vm1446 = vmor %vm1444, %vm1445
  %v1447 = vsel %vm1446, %v1438, %v1443
  %v1448 = vrsqrt.pop %v1213
  %v1449 = vmul.f32 %v1448, %v1213
  %v1450 = vmul.f32 %v1449, %v1448
  %v1451 = vmul.f32 0.5, %v1450
  %v1452 = vsub.f32 1.5, %v1451
  %v1453 = vmul.f32 %v1448, %v1452
  %vm1454 = vweird.f32 %v1213
  %vm1455 = vweird.f32 %v1448
  %vm1456 = vmor %vm1454, %vm1455
  %v1457 = vsel %vm1456, %v1448, %v1453
  %v1458 = vrsqrt.pop %v1214
  %v1459 = vmul.f32 %v1458, %v1214
  %v1460 = vmul.f32 %v1459, %v1458
  %v1461 = vmul.f32 0.5, %v1460
  %v1462 = vsub.f32 1.5, %v1461
  %v1463 = vmul.f32 %v1458, %v1462
  %vm1464 = vweird.f32 %v1214
  %vm1465 = vweird.f32 %v1458
  %vm1466 = vmor %vm1464, %vm1465
  %v1467 = vsel %vm1466, %v1458, %v1463
  %v1468 = vrsqrt.pop %v1215
  %v1469 = vmul.f32 %v1468, %v1215
  %v1470 = vmul.f32 %v1469, %v1468
  %v1471 = vmul.f32 0.5, %v1470
  %v1472 = vsub.f32 1.5, %v1471
  %v1473 = vmul.f32 %v1468, %v1472
  %vm1474 = vweird.f32 %v1215
  %vm1475 = vweird.f32 %v1468
  %vm1476 = vmor %vm1474, %vm1475
  %v1477 = vsel %vm1476, %v1468, %v1473
  %v1478 = vrsqrt.pop %v1216
  %v1479 = vmul.f32 %v1478, %v1216
  %v1480 = vmul.f32 %v1479, %v1478
  %v1481 = vmul.f32 0.5, %v1480
  %v1482 = vsub.f32 1.5, %v1481
  %v1483 = vmul.f32 %v1478, %v1482
  %vm1484 = vweird.f32 %v1216
  %vm1485 = vweird.f32 %v1478
  %vm1486 = vmor %vm1484, %vm1485
  %v1487 = vsel %vm1486, %v1478, %v1483
  %v1488 = vrsqrt.pop %v1217
  %v1489 = vmul.f32 %v1488, %v1217
  %v1490 = vmul.f32 %v1489, %v1488
  %v1491 = vmul.f32 0.5, %v1490
  %v1492 = vsub.f32 1.5, %v1491
  %v1493 = vmul.f32 %v1488, %v1492
  %vm1494 = vweird.f32 %v1217
  %vm1495 = vweird.f32 %v1488
  %vm1496 = vmor %vm1494, %vm1495
  %v1497 = vsel %vm1496, %v1488, %v1493
  %v1498 = vrsqrt.pop %v1218
  %v1499 = vmul.f32 %v1498, %v1218
  %v1500 = vmul.f32 %v1499, %v1498
  %v1501 = vmul.f32 0.5, %v1500
  %v1502 = vsub.f32 1.5, %v1501
  %v1503 = vmul.f32 %v1498, %v1502
  %vm1504 = vweird.f32 %v1218
  %vm1505 = vweird.f32 %v1498
  %vm1506 = vmor %vm1504, %vm1505
  %v1507 = vsel %vm1506, %v1498, %v1503
  %v1508 = vrsqrt.pop %v1219
  %v1509 = vmul.f32 %v1508, %v1219
  %v1510 = vmul.f32 %v1509, %v1508
  %v1511 = vmul.f32 0.5, %v1510
  %v1512 = vsub.f32 1.5, %v1511
  %v1513 = vmul.f32 %v1508, %v1512
  %vm1514 = vweird.f32 %v1219
  %vm1515 = vweird.f32 %v1508
  %vm1516 = vmor %vm1514, %vm1515
  %v1517 = vsel %vm1516, %v1508, %v1513
  %v1518 = vrsqrt.pop %v1220
  %v1519 = vmul.f32 %v1518, %v1220
  %v1520 = vmul.f32 %v1519, %v1518
  %v1521 = vmul.f32 0.5, %v1520
  %v1522 = vsub.f32 1.5, %v1521
  %v1523 = vmul.f32 %v1518, %v1522
  %vm1524 = vweird.f32 %v1220
  %vm1525 = vweird.f32 %v1518
  %vm1526 = vmor %vm1524, %vm1525
  %v1527 = vsel %vm1526, %v1518, %v1523
  %v1528 = vrsqrt.pop %v1221
  %v1529 = vmul.f32 %v1528, %v1221
  %v1530 = vmul.f32 %v1529, %v1528
  %v1531 = vmul.f32 0.5, %v1530
  %v1532 = vsub.f32 1.5, %v1531
  %v1533 = vmul.f32 %v1528, %v1532
  %vm1534 = vweird.f32 %v1221
  %vm1535 = vweird.f32 %v1528
  %vm1536 = vmor %vm1534, %vm1535
  %v1537 = vsel %vm1536, %v1528, %v1533
  %v1538 = vrsqrt.pop %v1222
  %v1539 = vmul.f32 %v1538, %v1222
  %v1540 = vmul.f32 %v1539, %v1538
  %v1541 = vmul.f32 0.5, %v1540
  %v1542 = vsub.f32 1.5, %v1541
  %v1543 = vmul.f32 %v1538, %v1542
  %vm1544 = vweird.f32 %v1222
  %vm1545 = vweird.f32 %v1538
  %vm1546 = vmor %vm1544, %vm1545
  %v1547 = vsel %vm1546, %v1538, %v1543
  %v1548 = vrsqrt.pop %v1223
  %v1549 = vmul.f32 %v1548, %v1223
  %v1550 = vmul.f32 %v1549, %v1548
  %v1551 = vmul.f32 0.5, %v1550
  %v1552 = vsub.f32 1.5, %v1551
  %v1553 = vmul.f32 %v1548, %v1552
  %vm1554 = vweird.f32 %v1223
  %vm1555 = vweird.f32 %v1548
  %vm1556 = vmor %vm1554, %vm1555
  %v1557 = vsel %vm1556, %v1548, %v1553
  %v1558 = vrsqrt.pop %v1224
  %v1559 = vmul.f32 %v1558, %v1224
  %v1560 = vmul.f32 %v1559, %v1558
  %v1561 = vmul.f32 0.5, %v1560
  %v1562 = vsub.f32 1.5, %v1561
  %v1563 = vmul.f32 %v1558, %v1562
  %vm1564 = vweird.f32 %v1224
  %vm1565 = vweird.f32 %v1558
  %vm1566 = vmor %vm1564, %vm1565
  %v1567 = vsel %vm1566, %v1558, %v1563
  %v1568 = vrsqrt.pop %v1225
  %v1569 = vmul.f32 %v1568, %v1225
  %v1570 = vmul.f32 %v1569, %v1568
  %v1571 = vmul.f32 0.5, %v1570
  %v1572 = vsub.f32 1.5, %v1571
  %v1573 = vmul.f32 %v1568, %v1572
  %vm1574 = vweird.f32 %v1225
  %vm1575 = vweird.f32 %v1568
  %vm1576 = vmor %vm1574, %vm1575
  %v1577 = vsel %vm1576, %v1568, %v1573
  %v1578 = vrsqrt.pop %v1226
  %v1579 = vmul.f32 %v1578, %v1226
  %v1580 = vmul.f32 %v1579, %v1578
  %v1581 = vmul.f32 0.5, %v1580
  %v1582 = vsub.f32 1.5, %v1581
  %v1583 = vmul.f32 %v1578, %v1582
  %vm1584 = vweird.f32 %v1226
  %vm1585 = vweird.f32 %v1578
  %vm1586 = vmor %vm1584, %vm1585
  %v1587 = vsel %vm1586, %v1578, %v1583
  %v1588 = vrsqrt.pop %v1227
  %v1589 = vmul.f32 %v1588, %v1227
  %v1590 = vmul.f32 %v1589, %v1588
  %v1591 = vmul.f32 0.5, %v1590
  %v1592 = vsub.f32 1.5, %v1591
  %v1593 = vmul.f32 %v1588, %v1592
  %vm1594 = vweird.f32 %v1227
  %vm1595 = vweird.f32 %v1588
  %vm1596 = vmor %vm1594, %vm1595
  %v1597 = vsel %vm1596, %v1588, %v1593
  %v1598 = vrsqrt.pop %v1228
  %v1599 = vmul.f32 %v1598, %v1228
  %v1600 = vmul.f32 %v1599, %v1598
  %v1601 = vmul.f32 0.5, %v1600
  %v1602 = vsub.f32 1.5, %v1601
  %v1603 = vmul.f32 %v1598, %v1602
  %vm1604 = vweird.f32 %v1228
  %vm1605 = vweird.f32 %v1598
  %vm1606 = vmor %vm1604, %vm1605
  %v1607 = vsel %vm1606, %v1598, %v1603
  %v1608 = vrsqrt.pop %v1229
  %v1609 = vmul.f32 %v1608, %v1229
  %v1610 = vmul.f32 %v1609, %v1608
  %v1611 = vmul.f32 0.5, %v1610
  %v1612 = vsub.f32 1.5, %v1611
  %v1613 = vmul.f32 %v1608, %v1612
  %vm1614 = vweird.f32 %v1229
  %vm1615 = vweird.f32 %v1608
  %vm1616 = vmor %vm1614, %vm1615
  %v1617 = vsel %vm1616, %v1608, %v1613
  %v1618 = vrsqrt.pop %v1230
  %v1619 = vmul.f32 %v1618, %v1230
  %v1620 = vmul.f32 %v1619, %v1618
  %v1621 = vmul.f32 0.5, %v1620
  %v1622 = vsub.f32 1.5, %v1621
  %v1623 = vmul.f32 %v1618, %v1622
  %vm1624 = vweird.f32 %v1230
  %vm1625 = vweird.f32 %v1618
  %vm1626 = vmor %vm1624, %vm1625
  %v1627 = vsel %vm1626, %v1618, %v1623
  %v1628 = vrsqrt.pop %v1231
  %v1629 = vmul.f32 %v1628, %v1231
  %v1630 = vmul.f32 %v1629, %v1628
  %v1631 = vmul.f32 0.5, %v1630
  %v1632 = vsub.f32 1.5, %v1631
  %v1633 = vmul.f32 %v1628, %v1632
  %vm1634 = vweird.f32 %v1231
  %vm1635 = vweird.f32 %v1628
  %vm1636 = vmor %vm1634, %vm1635
  %v1637 = vsel %vm1636, %v1628, %v1633
  %v1638 = vrsqrt.pop %v1232
  %v1639 = vmul.f32 %v1638, %v1232
  %v1640 = vmul.f32 %v1639, %v1638
  %v1641 = vmul.f32 0.5, %v1640
  %v1642 = vsub.f32 1.5, %v1641
  %v1643 = vmul.f32 %v1638, %v1642
  %vm1644 = vweird.f32 %v1232
  %vm1645 = vweird.f32 %v1638
  %vm1646 = vmor %vm1644, %vm1645
  %v1647 = vsel %vm1646, %v1638, %v1643
  %v1648 = vrsqrt.pop %v1233
  %v1649 = vmul.f32 %v1648, %v1233
  %v1650 = vmul.f32 %v1649, %v1648
  %v1651 = vmul.f32 0.5, %v1650
  %v1652 = vsub.f32 1.5, %v1651
  %v1653 = vmul.f32 %v1648, %v1652
  %vm1654 = vweird.f32 %v1233
  %vm1655 = vweird.f32 %v1648
  %vm1656 = vmor %vm1654, %vm1655
  %v1657 = vsel %vm1656, %v1648, %v1653
  %v1658 = vrsqrt.pop %v1234
  %v1659 = vmul.f32 %v1658, %v1234
  %v1660 = vmul.f32 %v1659, %v1658
  %v1661 = vmul.f32 0.5, %v1660
  %v1662 = vsub.f32 1.5, %v1661
  %v1663 = vmul.f32 %v1658, %v1662
  %vm1664 = vweird.f32 %v1234
  %vm1665 = vweird.f32 %v1658
  %vm1666 = vmor %vm1664, %vm1665
  %v1667 = vsel %vm1666, %v1658, %v1663
  %v1668 = vrsqrt.pop %v1235
  %v1669 = vmul.f32 %v1668, %v1235
  %v1670 = vmul.f32 %v1669, %v1668
  %v1671 = vmul.f32 0.5, %v1670
  %v1672 = vsub.f32 1.5, %v1671
  %v1673 = vmul.f32 %v1668, %v1672
  %vm1674 = vweird.f32 %v1235
  %vm1675 = vweird.f32 %v1668
  %vm1676 = vmor %vm1674, %vm1675
  %v1677 = vsel %vm1676, %v1668, %v1673
  %v1678 = vrsqrt.pop %v1236
  %v1679 = vmul.f32 %v1678, %v1236
  %v1680 = vmul.f32 %v1679, %v1678
  %v1681 = vmul.f32 0.5, %v1680
  %v1682 = vsub.f32 1.5, %v1681
  %v1683 = vmul.f32 %v1678, %v1682
  %vm1684 = vweird.f32 %v1236
  %vm1685 = vweird.f32 %v1678
  %vm1686 = vmor %vm1684, %vm1685
  %v1687 = vsel %vm1686, %v1678, %v1683
  %v1688 = vrsqrt.pop %v1237
  %v1689 = vmul.f32 %v1688, %v1237
  %v1690 = vmul.f32 %v1689, %v1688
  %v1691 = vmul.f32 0.5, %v1690
  %v1692 = vsub.f32 1.5, %v1691
  %v1693 = vmul.f32 %v1688, %v1692
  %vm1694 = vweird.f32 %v1237
  %vm1695 = vweird.f32 %v1688
  %vm1696 = vmor %vm1694, %vm1695
  %v1697 = vsel %vm1696, %v1688, %v1693
  %v1698 = vrsqrt.pop %v1238
  %v1699 = vmul.f32 %v1698, %v1238
  %v1700 = vmul.f32 %v1699, %v1698
  %v1701 = vmul.f32 0.5, %v1700
  %v1702 = vsub.f32 1.5, %v1701
  %v1703 = vmul.f32 %v1698, %v1702
  %vm1704 = vweird.f32 %v1238
  %vm1705 = vweird.f32 %v1698
  %vm1706 = vmor %vm1704, %vm1705
  %v1707 = vsel %vm1706, %v1698, %v1703
  %v1708 = vrsqrt.pop %v1239
  %v1709 = vmul.f32 %v1708, %v1239
  %v1710 = vmul.f32 %v1709, %v1708
  %v1711 = vmul.f32 0.5, %v1710
  %v1712 = vsub.f32 1.5, %v1711
  %v1713 = vmul.f32 %v1708, %v1712
  %vm1714 = vweird.f32 %v1239
  %vm1715 = vweird.f32 %v1708
  %vm1716 = vmor %vm1714, %vm1715
  %v1717 = vsel %vm1716, %v1708, %v1713
  %v1718 = vrsqrt.pop %v1240
  %v1719 = vmul.f32 %v1718, %v1240
  %v1720 = vmul.f32 %v1719, %v1718
  %v1721 = vmul.f32 0.5, %v1720
  %v1722 = vsub.f32 1.5, %v1721
  %v1723 = vmul.f32 %v1718, %v1722
  %vm1724 = vweird.f32 %v1240
  %vm1725 = vweird.f32 %v1718
  %vm1726 = vmor %vm1724, %vm1725
  %v1727 = vsel %vm1726, %v1718, %v1723
  %v1728 = vrsqrt.pop %v1241
  %v1729 = vmul.f32 %v1728, %v1241
  %v1730 = vmul.f32 %v1729, %v1728
  %v1731 = vmul.f32 0.5, %v1730
  %v1732 = vsub.f32 1.5, %v1731
  %v1733 = vmul.f32 %v1728, %v1732
  %vm1734 = vweird.f32 %v1241
  %vm1735 = vweird.f32 %v1728
  %vm1736 = vmor %vm1734, %vm1735
  %v1737 = vsel %vm1736, %v1728, %v1733
  %v1738 = vrsqrt.pop %v1242
  %v1739 = vmul.f32 %v1738, %v1242
  %v1740 = vmul.f32 %v1739, %v1738
  %v1741 = vmul.f32 0.5, %v1740
  %v1742 = vsub.f32 1.5, %v1741
  %v1743 = vmul.f32 %v1738, %v1742
  %vm1744 = vweird.f32 %v1242
  %vm1745 = vweird.f32 %v1738
  %vm1746 = vmor %vm1744, %vm1745
  %v1747 = vsel %vm1746, %v1738, %v1743
  %v1748 = vrsqrt.pop %v1243
  %v1749 = vmul.f32 %v1748, %v1243
  %v1750 = vmul.f32 %v1749, %v1748
  %v1751 = vmul.f32 0.5, %v1750
  %v1752 = vsub.f32 1.5, %v1751
  %v1753 = vmul.f32 %v1748, %v1752
  %vm1754 = vweird.f32 %v1243
  %vm1755 = vweird.f32 %v1748
  %vm1756 = vmor %vm1754, %vm1755
  %v1757 = vsel %vm1756, %v1748, %v1753
  %v1758 = vrsqrt.pop %v1244
  %v1759 = vmul.f32 %v1758, %v1244
  %v1760 = vmul.f32 %v1759, %v1758
  %v1761 = vmul.f32 0.5, %v1760
  %v1762 = vsub.f32 1.5, %v1761
  %v1763 = vmul.f32 %v1758, %v1762
  %vm1764 = vweird.f32 %v1244
  %vm1765 = vweird.f32 %v1758
  %vm1766 = vmor %vm1764, %vm1765
  %v1767 = vsel %vm1766, %v1758, %v1763
  %v1768 = vrsqrt.pop %v1245
  %v1769 = vmul.f32 %v1768, %v1245
  %v1770 = vmul.f32 %v1769, %v1768
  %v1771 = vmul.f32 0.5, %v1770
  %v1772 = vsub.f32 1.5, %v1771
  %v1773 = vmul.f32 %v1768, %v1772
  %vm1774 = vweird.f32 %v1245
  %vm1775 = vweird.f32 %v1768
  %vm1776 = vmor %vm1774, %vm1775
  %v1777 = vsel %vm1776, %v1768, %v1773
  %v1778 = vrsqrt.pop %v1246
  %v1779 = vmul.f32 %v1778, %v1246
  %v1780 = vmul.f32 %v1779, %v1778
  %v1781 = vmul.f32 0.5, %v1780
  %v1782 = vsub.f32 1.5, %v1781
  %v1783 = vmul.f32 %v1778, %v1782
  %vm1784 = vweird.f32 %v1246
  %vm1785 = vweird.f32 %v1778
  %vm1786 = vmor %vm1784, %vm1785
  %v1787 = vsel %vm1786, %v1778, %v1783
  %v1788 = vrsqrt.pop %v1247
  %v1789 = vmul.f32 %v1788, %v1247
  %v1790 = vmul.f32 %v1789, %v1788
  %v1791 = vmul.f32 0.5, %v1790
  %v1792 = vsub.f32 1.5, %v1791
  %v1793 = vmul.f32 %v1788, %v1792
  %vm1794 = vweird.f32 %v1247
  %vm1795 = vweird.f32 %v1788
  %vm1796 = vmor %vm1794, %vm1795
  %v1797 = vsel %vm1796, %v1788, %v1793
  %v1798 = vrsqrt.pop %v1248
  %v1799 = vmul.f32 %v1798, %v1248
  %v1800 = vmul.f32 %v1799, %v1798
  %v1801 = vmul.f32 0.5, %v1800
  %v1802 = vsub.f32 1.5, %v1801
  %v1803 = vmul.f32 %v1798, %v1802
  %vm1804 = vweird.f32 %v1248
  %vm1805 = vweird.f32 %v1798
  %vm1806 = vmor %vm1804, %vm1805
  %v1807 = vsel %vm1806, %v1798, %v1803
  %v1808 = vrsqrt.pop %v1249
  %v1809 = vmul.f32 %v1808, %v1249
  %v1810 = vmul.f32 %v1809, %v1808
  %v1811 = vmul.f32 0.5, %v1810
  %v1812 = vsub.f32 1.5, %v1811
  %v1813 = vmul.f32 %v1808, %v1812
  %vm1814 = vweird.f32 %v1249
  %vm1815 = vweird.f32 %v1808
  %vm1816 = vmor %vm1814, %vm1815
  %v1817 = vsel %vm1816, %v1808, %v1813
  %v1818 = vrsqrt.pop %v1250
  %v1819 = vmul.f32 %v1818, %v1250
  %v1820 = vmul.f32 %v1819, %v1818
  %v1821 = vmul.f32 0.5, %v1820
  %v1822 = vsub.f32 1.5, %v1821
  %v1823 = vmul.f32 %v1818, %v1822
  %vm1824 = vweird.f32 %v1250
  %vm1825 = vweird.f32 %v1818
  %vm1826 = vmor %vm1824, %vm1825
  %v1827 = vsel %vm1826, %v1818, %v1823
  %v1828 = vrsqrt.pop %v1251
  %v1829 = vmul.f32 %v1828, %v1251
  %v1830 = vmul.f32 %v1829, %v1828
  %v1831 = vmul.f32 0.5, %v1830
  %v1832 = vsub.f32 1.5, %v1831
  %v1833 = vmul.f32 %v1828, %v1832
  %vm1834 = vweird.f32 %v1251
  %vm1835 = vweird.f32 %v1828
  %vm1836 = vmor %vm1834, %vm1835
  %v1837 = vsel %vm1836, %v1828, %v1833
  %v1838 = vrsqrt.pop %v1252
  %v1839 = vmul.f32 %v1838, %v1252
  %v1840 = vmul.f32 %v1839, %v1838
  %v1841 = vmul.f32 0.5, %v1840
  %v1842 = vsub.f32 1.5, %v1841
  %v1843 = vmul.f32 %v1838, %v1842
  %vm1844 = vweird.f32 %v1252
  %vm1845 = vweird.f32 %v1838
  %vm1846 = vmor %vm1844, %vm1845
  %v1847 = vsel %vm1846, %v1838, %v1843
  %v1848 = vrsqrt.pop %v1253
  %v1849 = vmul.f32 %v1848, %v1253
  %v1850 = vmul.f32 %v1849, %v1848
  %v1851 = vmul.f32 0.5, %v1850
  %v1852 = vsub.f32 1.5, %v1851
  %v1853 = vmul.f32 %v1848, %v1852
  %vm1854 = vweird.f32 %v1253
  %vm1855 = vweird.f32 %v1848
  %vm1856 = vmor %vm1854, %vm1855
  %v1857 = vsel %vm1856, %v1848, %v1853
  %v1858 = vrsqrt.pop %v1254
  %v1859 = vmul.f32 %v1858, %v1254
  %v1860 = vmul.f32 %v1859, %v1858
  %v1861 = vmul.f32 0.5, %v1860
  %v1862 = vsub.f32 1.5, %v1861
  %v1863 = vmul.f32 %v1858, %v1862
  %vm1864 = vweird.f32 %v1254
  %vm1865 = vweird.f32 %v1858
  %vm1866 = vmor %vm1864, %vm1865
  %v1867 = vsel %vm1866, %v1858, %v1863
  %v1868 = vrsqrt.pop %v1255
  %v1869 = vmul.f32 %v1868, %v1255
  %v1870 = vmul.f32 %v1869, %v1868
  %v1871 = vmul.f32 0.5, %v1870
  %v1872 = vsub.f32 1.5, %v1871
  %v1873 = vmul.f32 %v1868, %v1872
  %vm1874 = vweird.f32 %v1255
  %vm1875 = vweird.f32 %v1868
  %vm1876 = vmor %vm1874, %vm1875
  %v1877 = vsel %vm1876, %v1868, %v1873
  %v1878 = vrsqrt.pop %v1256
  %v1879 = vmul.f32 %v1878, %v1256
  %v1880 = vmul.f32 %v1879, %v1878
  %v1881 = vmul.f32 0.5, %v1880
  %v1882 = vsub.f32 1.5, %v1881
  %v1883 = vmul.f32 %v1878, %v1882
  %vm1884 = vweird.f32 %v1256
  %vm1885 = vweird.f32 %v1878
  %vm1886 = vmor %vm1884, %vm1885
  %v1887 = vsel %vm1886, %v1878, %v1883
  %v1888 = vrsqrt.pop %v1257
  %v1889 = vmul.f32 %v1888, %v1257
  %v1890 = vmul.f32 %v1889, %v1888
  %v1891 = vmul.f32 0.5, %v1890
  %v1892 = vsub.f32 1.5, %v1891
  %v1893 = vmul.f32 %v1888, %v1892
  %vm1894 = vweird.f32 %v1257
  %vm1895 = vweird.f32 %v1888
  %vm1896 = vmor %vm1894, %vm1895
  %v1897 = vsel %vm1896, %v1888, %v1893
  %v1898 = vsub.f32 %v298, %v682
  %v1899 = vsub.f32 %v301, %v683
  %v1900 = vsub.f32 %v304, %v684
  %v1901 = vsub.f32 %v307, %v685
  %v1902 = vsub.f32 %v310, %v686
  %v1903 = vsub.f32 %v313, %v687
  %v1904 = vsub.f32 %v316, %v688
  %v1905 = vsub.f32 %v319, %v689
  %v1906 = vsub.f32 %v322, %v690
  %v1907 = vsub.f32 %v325, %v691
  %v1908 = vsub.f32 %v328, %v692
  %v1909 = vsub.f32 %v331, %v693
  %v1910 = vsub.f32 %v334, %v694
  %v1911 = vsub.f32 %v337, %v695
  %v1912 = vsub.f32 %v340, %v696
  %v1913 = vsub.f32 %v343, %v697
  %v1914 = vsub.f32 %v346, %v698
  %v1915 = vsub.f32 %v349, %v699
  %v1916 = vsub.f32 %v352, %v700
  %v1917 = vsub.f32 %v355, %v701
  %v1918 = vsub.f32 %v358, %v702
  %v1919 = vsub.f32 %v361, %v703
  %v1920 = vsub.f32 %v364, %v704
  %v1921 = vsub.f32 %v367, %v705
  %v1922 = vsub.f32 %v370, %v706
  %v1923 = vsub.f32 %v373, %v707
  %v1924 = vsub.f32 %v376, %v708
  %v1925 = vsub.f32 %v379, %v709
  %v1926 = vsub.f32 %v382, %v710
  %v1927 = vsub.f32 %v385, %v711
  %v1928 = vsub.f32 %v388, %v712
  %v1929 = vsub.f32 %v391, %v713
  %v1930 = vsub.f32 %v394, %v714
  %v1931 = vsub.f32 %v397, %v715
  %v1932 = vsub.f32 %v400, %v716
  %v1933 = vsub.f32 %v403, %v717
  %v1934 = vsub.f32 %v406, %v718
  %v1935 = vsub.f32 %v409, %v719
  %v1936 = vsub.f32 %v412, %v720
  %v1937 = vsub.f32 %v415, %v721
  %v1938 = vsub.f32 %v418, %v722
  %v1939 = vsub.f32 %v421, %v723
  %v1940 = vsub.f32 %v424, %v724
  %v1941 = vsub.f32 %v427, %v725
  %v1942 = vsub.f32 %v430, %v726
  %v1943 = vsub.f32 %v433, %v727
  %v1944 = vsub.f32 %v436, %v728
  %v1945 = vsub.f32 %v439, %v729
  %v1946 = vsub.f32 %v442, %v730
  %v1947 = vsub.f32 %v445, %v731
  %v1948 = vsub.f32 %v448, %v732
  %v1949 = vsub.f32 %v451, %v733
  %v1950 = vsub.f32 %v454, %v734
  %v1951 = vsub.f32 %v457, %v735
  %v1952 = vsub.f32 %v460, %v736
  %v1953 = vsub.f32 %v463, %v737
  %v1954 = vsub.f32 %v466, %v738
  %v1955 = vsub.f32 %v469, %v739
  %v1956 = vsub.f32 %v472, %v740
  %v1957 = vsub.f32 %v475, %v741
  %v1958 = vsub.f32 %v478, %v742
  %v1959 = vsub.f32 %v481, %v743
  %v1960 = vsub.f32 %v484, %v744
  %v1961 = vsub.f32 %v487, %v745
  %v1962 = vperm.slane %v80, 0
  %v1963 = vmul.f32 %v1267, %v1962
  %v1964 = vmul.f32 %v1277, %v1962
  %v1965 = vmul.f32 %v1287, %v1962
  %v1966 = vmul.f32 %v1297, %v1962
  %v1967 = vmul.f32 %v1307, %v1962
  %v1968 = vmul.f32 %v1317, %v1962
  %v1969 = vmul.f32 %v1327, %v1962
  %v1970 = vmul.f32 %v1337, %v1962
  %v1971 = vmul.f32 %v1347, %v1962
  %v1972 = vmul.f32 %v1357, %v1962
  %v1973 = vmul.f32 %v1367, %v1962
  %v1974 = vmul.f32 %v1377, %v1962
  %v1975 = vmul.f32 %v1387, %v1962
  %v1976 = vmul.f32 %v1397, %v1962
  %v1977 = vmul.f32 %v1407, %v1962
  %v1978 = vmul.f32 %v1417, %v1962
  %v1979 = vmul.f32 %v1427, %v1962
  %v1980 = vmul.f32 %v1437, %v1962
  %v1981 = vmul.f32 %v1447, %v1962
  %v1982 = vmul.f32 %v1457, %v1962
  %v1983 = vmul.f32 %v1467, %v1962
  %v1984 = vmul.f32 %v1477, %v1962
  %v1985 = vmul.f32 %v1487, %v1962
  %v1986 = vmul.f32 %v1497, %v1962
  %v1987 = vmul.f32 %v1507, %v1962
  %v1988 = vmul.f32 %v1517, %v1962
  %v1989 = vmul.f32 %v1527, %v1962
  %v1990 = vmul.f32 %v1537, %v1962
  %v1991 = vmul.f32 %v1547, %v1962
  %v1992 = vmul.f32 %v1557, %v1962
  %v1993 = vmul.f32 %v1567, %v1962
  %v1994 = vmul.f32 %v1577, %v1962
  %v1995 = vmul.f32 %v1587, %v1962
  %v1996 = vmul.f32 %v1597, %v1962
  %v1997 = vmul.f32 %v1607, %v1962
  %v1998 = vmul.f32 %v1617, %v1962
  %v1999 = vmul.f32 %v1627, %v1962
  %v2000 = vmul.f32 %v1637, %v1962
  %v2001 = vmul.f32 %v1647, %v1962
  %v2002 = vmul.f32 %v1657, %v1962
  %v2003 = vmul.f32 %v1667, %v1962
  %v2004 = vmul.f32 %v1677, %v1962
  %v2005 = vmul.f32 %v1687, %v1962
  %v2006 = vmul.f32 %v1697, %v1962
  %v2007 = vmul.f32 %v1707, %v1962
  %v2008 = vmul.f32 %v1717, %v1962
  %v2009 = vmul.f32 %v1727, %v1962
  %v2010 = vmul.f32 %v1737, %v1962
  %v2011 = vmul.f32 %v1747, %v1962
  %v2012 = vmul.f32 %v1757, %v1962
  %v2013 = vmul.f32 %v1767, %v1962
  %v2014 = vmul.f32 %v1777, %v1962
  %v2015 = vmul.f32 %v1787, %v1962
  %v2016 = vmul.f32 %v1797, %v1962
  %v2017 = vmul.f32 %v1807, %v1962
  %v2018 = vmul.f32 %v1817, %v1962
  %v2019 = vmul.f32 %v1827, %v1962
  %v2020 = vmul.f32 %v1837, %v1962
  %v2021 = vmul.f32 %v1847, %v1962
  %v2022 = vmul.f32 %v1857, %v1962
  %v2023 = vmul.f32 %v1867, %v1962
  %v2024 = vmul.f32 %v1877, %v1962
  %v2025 = vmul.f32 %v1887, %v1962
  %v2026 = vmul.f32 %v1897, %v1962
  %v2027 = vmul.f32 %v1898, %v1963
  %v2028 = vmul.f32 %v1899, %v1964
  %v2029 = vmul.f32 %v1900, %v1965
  %v2030 = vmul.f32 %v1901, %v1966
  %v2031 = vmul.f32 %v1902, %v1967
  %v2032 = vmul.f32 %v1903, %v1968
  %v2033 = vmul.f32 %v1904, %v1969
  %v2034 = vmul.f32 %v1905, %v1970
  %v2035 = vmul.f32 %v1906, %v1971
  %v2036 = vmul.f32 %v1907, %v1972
  %v2037 = vmul.f32 %v1908, %v1973
  %v2038 = vmul.f32 %v1909, %v1974
  %v2039 = vmul.f32 %v1910, %v1975
  %v2040 = vmul.f32 %v1911, %v1976
  %v2041 = vmul.f32 %v1912, %v1977
  %v2042 = vmul.f32 %v1913, %v1978
  %v2043 = vmul.f32 %v1914, %v1979
  %v2044 = vmul.f32 %v1915, %v1980
  %v2045 = vmul.f32 %v1916, %v1981
  %v2046 = vmul.f32 %v1917, %v1982
  %v2047 = vmul.f32 %v1918, %v1983
  %v2048 = vmul.f32 %v1919, %v1984
  %v2049 = vmul.f32 %v1920, %v1985
  %v2050 = vmul.f32 %v1921, %v1986
  %v2051 = vmul.f32 %v1922, %v1987
  %v2052 = vmul.f32 %v1923, %v1988
  %v2053 = vmul.f32 %v1924, %v1989
  %v2054 = vmul.f32 %v1925, %v1990
  %v2055 = vmul.f32 %v1926, %v1991
  %v2056 = vmul.f32 %v1927, %v1992
  %v2057 = vmul.f32 %v1928, %v1993
  %v2058 = vmul.f32 %v1929, %v1994
  %v2059 = vmul.f32 %v1930, %v1995
  %v2060 = vmul.f32 %v1931, %v1996
  %v2061 = vmul.f32 %v1932, %v1997
  %v2062 = vmul.f32 %v1933, %v1998
  %v2063 = vmul.f32 %v1934, %v1999
  %v2064 = vmul.f32 %v1935, %v2000
  %v2065 = vmul.f32 %v1936, %v2001
  %v2066 = vmul.f32 %v1937, %v2002
  %v2067 = vmul.f32 %v1938, %v2003
  %v2068 = vmul.f32 %v1939, %v2004
  %v2069 = vmul.f32 %v1940, %v2005
  %v2070 = vmul.f32 %v1941, %v2006
  %v2071 = vmul.f32 %v1942, %v2007
  %v2072 = vmul.f32 %v1943, %v2008
  %v2073 = vmul.f32 %v1944, %v2009
  %v2074 = vmul.f32 %v1945, %v2010
  %v2075 = vmul.f32 %v1946, %v2011
  %v2076 = vmul.f32 %v1947, %v2012
  %v2077 = vmul.f32 %v1948, %v2013
  %v2078 = vmul.f32 %v1949, %v2014
  %v2079 = vmul.f32 %v1950, %v2015
  %v2080 = vmul.f32 %v1951, %v2016
  %v2081 = vmul.f32 %v1952, %v2017
  %v2082 = vmul.f32 %v1953, %v2018
  %v2083 = vmul.f32 %v1954, %v2019
  %v2084 = vmul.f32 %v1955, %v2020
  %v2085 = vmul.f32 %v1956, %v2021
  %v2086 = vmul.f32 %v1957, %v2022
  %v2087 = vmul.f32 %v1958, %v2023
  %v2088 = vmul.f32 %v1959, %v2024
  %v2089 = vmul.f32 %v1960, %v2025
  %v2090 = vmul.f32 %v1961, %v2026
  %v2091 = vperm.slane %v81, 0
  %v2092 = vadd.f32 %v2027, %v2091
  %v2093 = vadd.f32 %v2028, %v2091
  %v2094 = vadd.f32 %v2029, %v2091
  %v2095 = vadd.f32 %v2030, %v2091
  %v2096 = vadd.f32 %v2031, %v2091
  %v2097 = vadd.f32 %v2032, %v2091
  %v2098 = vadd.f32 %v2033, %v2091
  %v2099 = vadd.f32 %v2034, %v2091
  %v2100 = vadd.f32 %v2035, %v2091
  %v2101 = vadd.f32 %v2036, %v2091
  %v2102 = vadd.f32 %v2037, %v2091
  %v2103 = vadd.f32 %v2038, %v2091
  %v2104 = vadd.f32 %v2039, %v2091
  %v2105 = vadd.f32 %v2040, %v2091
  %v2106 = vadd.f32 %v2041, %v2091
  %v2107 = vadd.f32 %v2042, %v2091
  %v2108 = vadd.f32 %v2043, %v2091
  %v2109 = vadd.f32 %v2044, %v2091
  %v2110 = vadd.f32 %v2045, %v2091
  %v2111 = vadd.f32 %v2046, %v2091
  %v2112 = vadd.f32 %v2047, %v2091
  %v2113 = vadd.f32 %v2048, %v2091
  %v2114 = vadd.f32 %v2049, %v2091
  %v2115 = vadd.f32 %v2050, %v2091
  %v2116 = vadd.f32 %v2051, %v2091
  %v2117 = vadd.f32 %v2052, %v2091
  %v2118 = vadd.f32 %v2053, %v2091
  %v2119 = vadd.f32 %v2054, %v2091
  %v2120 = vadd.f32 %v2055, %v2091
  %v2121 = vadd.f32 %v2056, %v2091
  %v2122 = vadd.f32 %v2057, %v2091
  %v2123 = vadd.f32 %v2058, %v2091
  %v2124 = vadd.f32 %v2059, %v2091
  %v2125 = vadd.f32 %v2060, %v2091
  %v2126 = vadd.f32 %v2061, %v2091
  %v2127 = vadd.f32 %v2062, %v2091
  %v2128 = vadd.f32 %v2063, %v2091
  %v2129 = vadd.f32 %v2064, %v2091
  %v2130 = vadd.f32 %v2065, %v2091
  %v2131 = vadd.f32 %v2066, %v2091
  %v2132 = vadd.f32 %v2067, %v2091
  %v2133 = vadd.f32 %v2068, %v2091
  %v2134 = vadd.f32 %v2069, %v2091
  %v2135 = vadd.f32 %v2070, %v2091
  %v2136 = vadd.f32 %v2071, %v2091
  %v2137 = vadd.f32 %v2072, %v2091
  %v2138 = vadd.f32 %v2073, %v2091
  %v2139 = vadd.f32 %v2074, %v2091
  %v2140 = vadd.f32 %v2075, %v2091
  %v2141 = vadd.f32 %v2076, %v2091
  %v2142 = vadd.f32 %v2077, %v2091
  %v2143 = vadd.f32 %v2078, %v2091
  %v2144 = vadd.f32 %v2079, %v2091
  %v2145 = vadd.f32 %v2080, %v2091
  %v2146 = vadd.f32 %v2081, %v2091
  %v2147 = vadd.f32 %v2082, %v2091
  %v2148 = vadd.f32 %v2083, %v2091
  %v2149 = vadd.f32 %v2084, %v2091
  %v2150 = vadd.f32 %v2085, %v2091
  %v2151 = vadd.f32 %v2086, %v2091
  %v2152 = vadd.f32 %v2087, %v2091
  %v2153 = vadd.f32 %v2088, %v2091
  %v2154 = vadd.f32 %v2089, %v2091
  %v2155 = vadd.f32 %v2090, %v2091
  %v2156 = vmax.f32 %v2092, 0.0
  %v2157 = vmax.f32 %v2093, 0.0
  %v2158 = vmax.f32 %v2094, 0.0
  %v2159 = vmax.f32 %v2095, 0.0
  %v2160 = vmax.f32 %v2096, 0.0
  %v2161 = vmax.f32 %v2097, 0.0
  %v2162 = vmax.f32 %v2098, 0.0
  %v2163 = vmax.f32 %v2099, 0.0
  %v2164 = vmax.f32 %v2100, 0.0
  %v2165 = vmax.f32 %v2101, 0.0
  %v2166 = vmax.f32 %v2102, 0.0
  %v2167 = vmax.f32 %v2103, 0.0
  %v2168 = vmax.f32 %v2104, 0.0
  %v2169 = vmax.f32 %v2105, 0.0
  %v2170 = vmax.f32 %v2106, 0.0
  %v2171 = vmax.f32 %v2107, 0.0
  %v2172 = vmax.f32 %v2108, 0.0
  %v2173 = vmax.f32 %v2109, 0.0
  %v2174 = vmax.f32 %v2110, 0.0
  %v2175 = vmax.f32 %v2111, 0.0
  %v2176 = vmax.f32 %v2112, 0.0
  %v2177 = vmax.f32 %v2113, 0.0
  %v2178 = vmax.f32 %v2114, 0.0
  %v2179 = vmax.f32 %v2115, 0.0
  %v2180 = vmax.f32 %v2116, 0.0
  %v2181 = vmax.f32 %v2117, 0.0
  %v2182 = vmax.f32 %v2118, 0.0
  %v2183 = vmax.f32 %v2119, 0.0
  %v2184 = vmax.f32 %v2120, 0.0
  %v2185 = vmax.f32 %v2121, 0.0
  %v2186 = vmax.f32 %v2122, 0.0
  %v2187 = vmax.f32 %v2123, 0.0
  %v2188 = vmax.f32 %v2124, 0.0
  %v2189 = vmax.f32 %v2125, 0.0
  %v2190 = vmax.f32 %v2126, 0.0
  %v2191 = vmax.f32 %v2127, 0.0
  %v2192 = vmax.f32 %v2128, 0.0
  %v2193 = vmax.f32 %v2129, 0.0
  %v2194 = vmax.f32 %v2130, 0.0
  %v2195 = vmax.f32 %v2131, 0.0
  %v2196 = vmax.f32 %v2132, 0.0
  %v2197 = vmax.f32 %v2133, 0.0
  %v2198 = vmax.f32 %v2134, 0.0
  %v2199 = vmax.f32 %v2135, 0.0
  %v2200 = vmax.f32 %v2136, 0.0
  %v2201 = vmax.f32 %v2137, 0.0
  %v2202 = vmax.f32 %v2138, 0.0
  %v2203 = vmax.f32 %v2139, 0.0
  %v2204 = vmax.f32 %v2140, 0.0
  %v2205 = vmax.f32 %v2141, 0.0
  %v2206 = vmax.f32 %v2142, 0.0
  %v2207 = vmax.f32 %v2143, 0.0
  %v2208 = vmax.f32 %v2144, 0.0
  %v2209 = vmax.f32 %v2145, 0.0
  %v2210 = vmax.f32 %v2146, 0.0
  %v2211 = vmax.f32 %v2147, 0.0
  %v2212 = vmax.f32 %v2148, 0.0
  %v2213 = vmax.f32 %v2149, 0.0
  %v2214 = vmax.f32 %v2150, 0.0
  %v2215 = vmax.f32 %v2151, 0.0
  %v2216 = vmax.f32 %v2152, 0.0
  %v2217 = vmax.f32 %v2153, 0.0
  %v2218 = vmax.f32 %v2154, 0.0
  %v2219 = vmax.f32 %v2155, 0.0
  %2220 = vst.msk [vmem:[%s3] sm:$0xff] %vm489, %v2156
  %2221 = vst.msk [vmem:[%s3 + $0x8] sm:$0xff] %vm489, %v2157
  %2222 = vst.msk [vmem:[%s3 + $0x10] sm:$0xff] %vm489, %v2158
  %2223 = vst.msk [vmem:[%s3 + $0x18] sm:$0xff] %vm489, %v2159
  %2224 = vst.msk [vmem:[%s3 + $0x20] sm:$0xff] %vm489, %v2160
  %2225 = vst.msk [vmem:[%s3 + $0x28] sm:$0xff] %vm489, %v2161
  %2226 = vst.msk [vmem:[%s3 + $0x30] sm:$0xff] %vm489, %v2162
  %2227 = vst.msk [vmem:[%s3 + $0x38] sm:$0xff] %vm489, %v2163
  %2228 = vst.msk [vmem:[%s3 + $0x40] sm:$0xff] %vm489, %v2164
  %2229 = vst.msk [vmem:[%s3 + $0x48] sm:$0xff] %vm489, %v2165
  %2230 = vst.msk [vmem:[%s3 + $0x50] sm:$0xff] %vm489, %v2166
  %2231 = vst.msk [vmem:[%s3 + $0x58] sm:$0xff] %vm489, %v2167
  %2232 = vst.msk [vmem:[%s3 + $0x60] sm:$0xff] %vm489, %v2168
  %2233 = vst.msk [vmem:[%s3 + $0x68] sm:$0xff] %vm489, %v2169
  %2234 = vst.msk [vmem:[%s3 + $0x70] sm:$0xff] %vm489, %v2170
  %2235 = vst.msk [vmem:[%s3 + $0x78] sm:$0xff] %vm489, %v2171
  %2236 = vst.msk [vmem:[%s3 + $0x80] sm:$0xff] %vm489, %v2172
  %2237 = vst.msk [vmem:[%s3 + $0x88] sm:$0xff] %vm489, %v2173
  %2238 = vst.msk [vmem:[%s3 + $0x90] sm:$0xff] %vm489, %v2174
  %2239 = vst.msk [vmem:[%s3 + $0x98] sm:$0xff] %vm489, %v2175
  %2240 = vst.msk [vmem:[%s3 + $0xa0] sm:$0xff] %vm489, %v2176
  %2241 = vst.msk [vmem:[%s3 + $0xa8] sm:$0xff] %vm489, %v2177
  %2242 = vst.msk [vmem:[%s3 + $0xb0] sm:$0xff] %vm489, %v2178
  %2243 = vst.msk [vmem:[%s3 + $0xb8] sm:$0xff] %vm489, %v2179
  %2244 = vst.msk [vmem:[%s3 + $0xc0] sm:$0xff] %vm489, %v2180
  %2245 = vst.msk [vmem:[%s3 + $0xc8] sm:$0xff] %vm489, %v2181
  %2246 = vst.msk [vmem:[%s3 + $0xd0] sm:$0xff] %vm489, %v2182
  %2247 = vst.msk [vmem:[%s3 + $0xd8] sm:$0xff] %vm489, %v2183
  %2248 = vst.msk [vmem:[%s3 + $0xe0] sm:$0xff] %vm489, %v2184
  %2249 = vst.msk [vmem:[%s3 + $0xe8] sm:$0xff] %vm489, %v2185
  %2250 = vst.msk [vmem:[%s3 + $0xf0] sm:$0xff] %vm489, %v2186
  %2251 = vst.msk [vmem:[%s3 + $0xf8] sm:$0xff] %vm489, %v2187
  %2252 = vst.msk [vmem:[%s3 + $0x100] sm:$0xff] %vm489, %v2188
  %2253 = vst.msk [vmem:[%s3 + $0x108] sm:$0xff] %vm489, %v2189
  %2254 = vst.msk [vmem:[%s3 + $0x110] sm:$0xff] %vm489, %v2190
  %2255 = vst.msk [vmem:[%s3 + $0x118] sm:$0xff] %vm489, %v2191
  %2256 = vst.msk [vmem:[%s3 + $0x120] sm:$0xff] %vm489, %v2192
  %2257 = vst.msk [vmem:[%s3 + $0x128] sm:$0xff] %vm489, %v2193
  %2258 = vst.msk [vmem:[%s3 + $0x130] sm:$0xff] %vm489, %v2194
  %2259 = vst.msk [vmem:[%s3 + $0x138] sm:$0xff] %vm489, %v2195
  %2260 = vst.msk [vmem:[%s3 + $0x140] sm:$0xff] %vm489, %v2196
  %2261 = vst.msk [vmem:[%s3 + $0x148] sm:$0xff] %vm489, %v2197
  %2262 = vst.msk [vmem:[%s3 + $0x150] sm:$0xff] %vm489, %v2198
  %2263 = vst.msk [vmem:[%s3 + $0x158] sm:$0xff] %vm489, %v2199
  %2264 = vst.msk [vmem:[%s3 + $0x160] sm:$0xff] %vm489, %v2200
  %2265 = vst.msk [vmem:[%s3 + $0x168] sm:$0xff] %vm489, %v2201
  %2266 = vst.msk [vmem:[%s3 + $0x170] sm:$0xff] %vm489, %v2202
  %2267 = vst.msk [vmem:[%s3 + $0x178] sm:$0xff] %vm489, %v2203
  %2268 = vst.msk [vmem:[%s3 + $0x180] sm:$0xff] %vm489, %v2204
  %2269 = vst.msk [vmem:[%s3 + $0x188] sm:$0xff] %vm489, %v2205
  %2270 = vst.msk [vmem:[%s3 + $0x190] sm:$0xff] %vm489, %v2206
  %2271 = vst.msk [vmem:[%s3 + $0x198] sm:$0xff] %vm489, %v2207
  %2272 = vst.msk [vmem:[%s3 + $0x1a0] sm:$0xff] %vm489, %v2208
  %2273 = vst.msk [vmem:[%s3 + $0x1a8] sm:$0xff] %vm489, %v2209
  %2274 = vst.msk [vmem:[%s3 + $0x1b0] sm:$0xff] %vm489, %v2210
  %2275 = vst.msk [vmem:[%s3 + $0x1b8] sm:$0xff] %vm489, %v2211
  %2276 = vst.msk [vmem:[%s3 + $0x1c0] sm:$0xff] %vm489, %v2212
  %2277 = vst.msk [vmem:[%s3 + $0x1c8] sm:$0xff] %vm489, %v2213
  %2278 = vst.msk [vmem:[%s3 + $0x1d0] sm:$0xff] %vm489, %v2214
  %2279 = vst.msk [vmem:[%s3 + $0x1d8] sm:$0xff] %vm489, %v2215
  %2280 = vst.msk [vmem:[%s3 + $0x1e0] sm:$0xff] %vm489, %v2216
  %2281 = vst.msk [vmem:[%s3 + $0x1e8] sm:$0xff] %vm489, %v2217
  %2282 = vst.msk [vmem:[%s3 + $0x1f0] sm:$0xff] %vm489, %v2218
  %2283 = vst.msk [vmem:[%s3 + $0x1f8] sm:$0xff] %vm489, %v2219
  // Predicated region
  $region14: #{tpu_custom_call.1} parent=0 // pred_check
    _
  $region15: #{tpu_custom_call.1} parent=0 // pred_check_branch
    %2285 = sbr.rel (0) target = $region17
  $region16: #{tpu_custom_call.1} parent=0 // pred_region
    _
  $region17: #{tpu_custom_call.1} parent=0 // pred_fallthru
    _
  // Predicated region
  $region18: #{tpu_custom_call.1} parent=0 // pred_check
    _
  $region19: #{tpu_custom_call.1} parent=0 // pred_check_branch
    %2287 = sbr.rel (0) target = $region21
  $region20: #{tpu_custom_call.1} parent=0 // pred_region
    _
  $region21: #{tpu_custom_call.1} parent=0 // pred_fallthru
    _

</llo_original>
